<compile_context>
chip_gen: v6e
topology: v6e:2x2x1
jax: 0.10.0
libtpu: 0.0.40
codegen_flags: <defaults>
</compile_context>

<pallas_src>
import functools

import jax
import jax.numpy as jnp
from jax.experimental import pallas as pl
from jax.experimental.pallas import tpu as pltpu


# ----------------------------------------------------------------------------
# Fused Pallas kernel: all LSTM layers + Linear head in one invocation.
# ----------------------------------------------------------------------------
def fused_lstm_kernel(*refs, num_layers, time_steps, batch, hidden_size):
    """refs layout (inputs, then output, then scratch):

      refs[0]                      : (T*N, I)  flattened input sequence
      refs[1 + 3*l .. 3 + 3*l]     : layer l weights  W_ih^T (in,4H),
                                     W_hh^T (H,4H), bias (1,4H)  [gate order i,f,o,g]
      refs[3*L + 1]                : (H, 1)  output-head weight
      refs[3*L + 2]                : (1, 1)  output-head bias
      refs[3*L + 3]                : (T, 1)  kernel output
      refs[3*L + 4]                : (T*N, H) VMEM scratch (per-layer hidden seq)
    """
    T, N, H = time_steps, batch, hidden_size
    x_ref = refs[0]
    wout_ref = refs[3 * num_layers + 1]
    bout_ref = refs[3 * num_layers + 2]
    out_ref = refs[3 * num_layers + 3]
    y_scr = refs[3 * num_layers + 4]

    seq = x_ref[...]                                          # (T*N, in)
    for layer in range(num_layers):
        wih_ref = refs[3 * layer + 1]
        whh_ref = refs[3 * layer + 2]
        b_ref = refs[3 * layer + 3]

        # Hoisted input projection: one matmul for the whole sequence.
        gx = (jnp.dot(seq, wih_ref[...],
                      preferred_element_type=jnp.float32)
              + b_ref[...])                                   # (T*N, 4H)
        whh = whh_ref[...]                                    # (H, 4H)

        h = jnp.zeros((N, H), jnp.float32)
        c = jnp.zeros((N, H), jnp.float32)
        # Fully-unrolled serial recurrence (static indices, tiny T).
        for t in range(T):
            g = gx[t * N:(t + 1) * N, :] + jnp.dot(
                h, whh, preferred_element_type=jnp.float32)   # (N, 4H)
            s = jax.nn.sigmoid(g[:, :3 * H])                  # i | f | o (one EUP stream)
            g_g = jnp.tanh(g[:, 3 * H:])                      # candidate gate
            c = s[:, H:2 * H] * c + s[:, :H] * g_g
            h = s[:, 2 * H:3 * H] * jnp.tanh(c)
            y_scr[t * N:(t + 1) * N, :] = h
        seq = y_scr[...]                                      # (T*N, H)

    # Reproduce `.view(seq_length, len(x), H)[-1]`:
    # flat rows [(N-1)*T : N*T) of the (T*N, H) output.
    last = seq[(N - 1) * T:N * T, :]                          # (T, H)
    out_ref[...] = (jnp.dot(last, wout_ref[...],
                            preferred_element_type=jnp.float32)
                    + bout_ref[...])


# ----------------------------------------------------------------------------
# Wrapper
# ----------------------------------------------------------------------------
def lstm_forward(x, params, seq_length, hidden_size):
    """Full forward pass, matching the PyTorch module semantics."""
    # TODO(synk): nn.LSTM inter-layer dropout is train-only; omitted (inference).
    B, S, I = x.shape
    assert S == seq_length, "the .view() trick requires seq_length == x.shape[1]"
    T, N, H = B, S, hidden_size            # nn.LSTM: dim0 = time, dim1 = batch
    num_layers = len(params["lstm"])

    # Host-side gate permutation: PyTorch (i,f,g,o) -> (i,f,o,g) so the kernel
    # can do one wide sigmoid over the first 3H columns and one tanh over the
    # last H columns.
    perm = jnp.concatenate([jnp.arange(0, 2 * H),
                            jnp.arange(3 * H, 4 * H),
                            jnp.arange(2 * H, 3 * H)])

    flat_inputs = [x.reshape(T * N, I)]
    for (w_ih, w_hh, b_ih, b_hh) in params["lstm"]:
        flat_inputs.append(w_ih[perm].T)                         # (in, 4H)
        flat_inputs.append(w_hh[perm].T)                         # (H, 4H)
        flat_inputs.append((b_ih + b_hh)[perm].reshape(1, 4 * H))
    flat_inputs.append(params["out_w"].T)                        # (H, 1)
    flat_inputs.append(params["out_b"].reshape(1, 1))            # (1, 1)

    kernel = functools.partial(fused_lstm_kernel,
                               num_layers=num_layers,
                               time_steps=T, batch=N, hidden_size=H)
    return pl.pallas_call(
        kernel,
        out_shape=jax.ShapeDtypeStruct((T, 1), jnp.float32),
        scratch_shapes=[pltpu.VMEM((T * N, H), jnp.float32)],
    )(*flat_inputs)


# ----------------------------------------------------------------------------
# Pure-JAX reference (PyTorch gate order), for correctness check.
# ----------------------------------------------------------------------------
def lstm_forward_ref(x, params, seq_length, hidden_size):
    h_seq = x
    for (w_ih, w_hh, b_ih, b_hh) in params["lstm"]:
        T, N, _ = h_seq.shape
        H = hidden_size

        def step(carry, x_t):
            h_prev, c_prev = carry
            g = x_t @ w_ih.T + b_ih + h_prev @ w_hh.T + b_hh
            i = jax.nn.sigmoid(g[:, 0 * H:1 * H])
            f = jax.nn.sigmoid(g[:, 1 * H:2 * H])
            gg = jnp.tanh(g[:, 2 * H:3 * H])
            o = jax.nn.sigmoid(g[:, 3 * H:4 * H])
            c = f * c_prev + i * gg
            hh = o * jnp.tanh(c)
            return (hh, c), hh

        init = (jnp.zeros((N, H), jnp.float32), jnp.zeros((N, H), jnp.float32))
        _, h_seq = jax.lax.scan(step, init, h_seq)
    B = x.shape[0]
    last = h_seq.reshape(seq_length, B, hidden_size)[-1]
    return last @ params["out_w"].T + params["out_b"]


# ----------------------------------------------------------------------------
# Deterministic parameter init (uniform(-1/sqrt(H), 1/sqrt(H)), like PyTorch)
# ----------------------------------------------------------------------------
def init_params(key, input_size, hidden_size, num_layers):
    k = 1.0 / jnp.sqrt(hidden_size)
    layers = []
    for layer in range(num_layers):
        in_sz = input_size if layer == 0 else hidden_size
        key, k1, k2, k3, k4 = jax.random.split(key, 5)
        w_ih = jax.random.uniform(k1, (4 * hidden_size, in_sz),
                                  jnp.float32, -k, k)
        w_hh = jax.random.uniform(k2, (4 * hidden_size, hidden_size),
                                  jnp.float32, -k, k)
        b_ih = jax.random.uniform(k3, (4 * hidden_size,), jnp.float32, -k, k)
        b_hh = jax.random.uniform(k4, (4 * hidden_size,), jnp.float32, -k, k)
        layers.append((w_ih, w_hh, b_ih, b_hh))
    key, k5, k6 = jax.random.split(key, 3)
    out_w = jax.random.uniform(k5, (1, hidden_size), jnp.float32, -k, k)
    out_b = jax.random.uniform(k6, (1,), jnp.float32, -k, k)
    return {"lstm": layers, "out_w": out_w, "out_b": out_b}


# ----------------------------------------------------------------------------
if __name__ == "__main__":
    INPUT_SIZE = 4
    HIDDEN_SIZE = 32
    NUM_LAYERS = 2
    SEQ_LENGTH = 8     # must equal x.shape[1] (nn.LSTM batch dim)
    BATCH = 8          # len(x)

    key = jax.random.PRNGKey(0)
    key, xkey = jax.random.split(key)
    x = jax.random.normal(xkey, (BATCH, SEQ_LENGTH, INPUT_SIZE), jnp.float32)
    params = init_params(key, INPUT_SIZE, HIDDEN_SIZE, NUM_LAYERS)

    out = jax.block_until_ready(
        lstm_forward(x, params, SEQ_LENGTH, HIDDEN_SIZE))
    ref = jax.block_until_ready(
        lstm_forward_ref(x, params, SEQ_LENGTH, HIDDEN_SIZE))

    assert out.shape == (BATCH, 1), out.shape
    assert jnp.allclose(out, ref, atol=1e-5, rtol=1e-5), \
        f"max err {jnp.max(jnp.abs(out - ref))}"
    print("KERNEL_OK")
</pallas_src>

<mosaic_0001>
module attributes {stable_mosaic.version = 11 : i64} {
  func.func @fused_lstm_kernel(%arg0: memref<64x4xf32, #tpu.memory_space<vmem>>, %arg1: memref<4x128xf32, #tpu.memory_space<vmem>>, %arg2: memref<32x128xf32, #tpu.memory_space<vmem>>, %arg3: memref<1x128xf32, #tpu.memory_space<vmem>>, %arg4: memref<32x128xf32, #tpu.memory_space<vmem>>, %arg5: memref<32x128xf32, #tpu.memory_space<vmem>>, %arg6: memref<1x128xf32, #tpu.memory_space<vmem>>, %arg7: memref<32x1xf32, #tpu.memory_space<vmem>>, %arg8: memref<1x1xf32, #tpu.memory_space<vmem>>, %arg9: memref<8x1xf32, #tpu.memory_space<vmem>>, %arg10: memref<64x32xf32, #tpu.memory_space<vmem>>) attributes {dimension_semantics = [], scalar_prefetch = 0 : i64, scratch_operands = 1 : i64, tpu.core_type = #tpu.core_type<tc>} {
    %c0 = arith.constant 0 : index
    %c0_0 = arith.constant 0 : index
    %0 = vector.load %arg0[%c0, %c0_0] : memref<64x4xf32, #tpu.memory_space<vmem>>, vector<64x4xf32>
    %c0_1 = arith.constant 0 : index
    %c0_2 = arith.constant 0 : index
    %1 = vector.load %arg1[%c0_1, %c0_2] : memref<4x128xf32, #tpu.memory_space<vmem>>, vector<4x128xf32>
    %cst = arith.constant dense<0.000000e+00> : vector<64x128xf32>
    %2 = tpu.matmul %0, %1, %cst {dimension_numbers = #tpu.dot_dimension_numbers<[1], [0], [0], [1], [0, 0, 1, 1], [], []>} : vector<64x4xf32>, vector<4x128xf32>, vector<64x128xf32> -> vector<64x128xf32>
    %c0_3 = arith.constant 0 : index
    %c0_4 = arith.constant 0 : index
    %3 = vector.load %arg3[%c0_3, %c0_4] : memref<1x128xf32, #tpu.memory_space<vmem>>, vector<1x128xf32>
    %4 = vector.broadcast %3 : vector<1x128xf32> to vector<64x128xf32>
    %5 = arith.addf %2, %4 : vector<64x128xf32>
    %c0_5 = arith.constant 0 : index
    %c0_6 = arith.constant 0 : index
    %6 = vector.load %arg2[%c0_5, %c0_6] : memref<32x128xf32, #tpu.memory_space<vmem>>, vector<32x128xf32>
    %cst_7 = arith.constant 0.000000e+00 : f32
    %7 = vector.broadcast %cst_7 : f32 to vector<8x32xf32>
    %cst_8 = arith.constant 0.000000e+00 : f32
    %8 = vector.broadcast %cst_8 : f32 to vector<8x32xf32>
    %9 = vector.extract_strided_slice %5 {offsets = [0, 0], sizes = [8, 128], strides = [1, 1]} : vector<64x128xf32> to vector<8x128xf32>
    %cst_9 = arith.constant dense<0.000000e+00> : vector<8x128xf32>
    %10 = tpu.matmul %7, %6, %cst_9 {dimension_numbers = #tpu.dot_dimension_numbers<[1], [0], [0], [1], [0, 0, 1, 1], [], []>} : vector<8x32xf32>, vector<32x128xf32>, vector<8x128xf32> -> vector<8x128xf32>
    %11 = arith.addf %9, %10 : vector<8x128xf32>
    %12 = vector.extract_strided_slice %11 {offsets = [0, 0], sizes = [8, 96], strides = [1, 1]} : vector<8x128xf32> to vector<8x96xf32>
    %13 = arith.negf %12 : vector<8x96xf32>
    %14 = math.exp %13 : vector<8x96xf32>
    %cst_10 = arith.constant 1.000000e+00 : f32
    %15 = vector.broadcast %cst_10 : f32 to vector<8x96xf32>
    %16 = arith.addf %15, %14 : vector<8x96xf32>
    %17 = arith.divf %15, %16 : vector<8x96xf32>
    %18 = vector.extract_strided_slice %11 {offsets = [0, 96], sizes = [8, 32], strides = [1, 1]} : vector<8x128xf32> to vector<8x32xf32>
    %19 = math.tanh %18 : vector<8x32xf32>
    %20 = vector.extract_strided_slice %17 {offsets = [0, 32], sizes = [8, 32], strides = [1, 1]} : vector<8x96xf32> to vector<8x32xf32>
    %21 = arith.mulf %20, %8 : vector<8x32xf32>
    %22 = vector.extract_strided_slice %17 {offsets = [0, 0], sizes = [8, 32], strides = [1, 1]} : vector<8x96xf32> to vector<8x32xf32>
    %23 = arith.mulf %22, %19 : vector<8x32xf32>
    %24 = arith.addf %21, %23 : vector<8x32xf32>
    %25 = vector.extract_strided_slice %17 {offsets = [0, 64], sizes = [8, 32], strides = [1, 1]} : vector<8x96xf32> to vector<8x32xf32>
    %26 = math.tanh %24 : vector<8x32xf32>
    %27 = arith.mulf %25, %26 : vector<8x32xf32>
    %c0_11 = arith.constant 0 : index
    %c0_12 = arith.constant 0 : index
    %28 = vector.load %arg10[%c0_11, %c0_12] : memref<64x32xf32, #tpu.memory_space<vmem>>, vector<8x32xf32>
    tpu.vector_store %arg10[%c0_11, %c0_12], %27 {strides = array<i32>} : memref<64x32xf32, #tpu.memory_space<vmem>>, vector<8x32xf32>,
    %29 = vector.extract_strided_slice %5 {offsets = [8, 0], sizes = [8, 128], strides = [1, 1]} : vector<64x128xf32> to vector<8x128xf32>
    %cst_13 = arith.constant dense<0.000000e+00> : vector<8x128xf32>
    %30 = tpu.matmul %27, %6, %cst_13 {dimension_numbers = #tpu.dot_dimension_numbers<[1], [0], [0], [1], [0, 0, 1, 1], [], []>} : vector<8x32xf32>, vector<32x128xf32>, vector<8x128xf32> -> vector<8x128xf32>
    %31 = arith.addf %29, %30 : vector<8x128xf32>
    %32 = vector.extract_strided_slice %31 {offsets = [0, 0], sizes = [8, 96], strides = [1, 1]} : vector<8x128xf32> to vector<8x96xf32>
    %33 = arith.negf %32 : vector<8x96xf32>
    %34 = math.exp %33 : vector<8x96xf32>
    %cst_14 = arith.constant 1.000000e+00 : f32
    %35 = vector.broadcast %cst_14 : f32 to vector<8x96xf32>
    %36 = arith.addf %35, %34 : vector<8x96xf32>
    %37 = arith.divf %35, %36 : vector<8x96xf32>
    %38 = vector.extract_strided_slice %31 {offsets = [0, 96], sizes = [8, 32], strides = [1, 1]} : vector<8x128xf32> to vector<8x32xf32>
    %39 = math.tanh %38 : vector<8x32xf32>
    %40 = vector.extract_strided_slice %37 {offsets = [0, 32], sizes = [8, 32], strides = [1, 1]} : vector<8x96xf32> to vector<8x32xf32>
    %41 = arith.mulf %40, %24 : vector<8x32xf32>
    %42 = vector.extract_strided_slice %37 {offsets = [0, 0], sizes = [8, 32], strides = [1, 1]} : vector<8x96xf32> to vector<8x32xf32>
    %43 = arith.mulf %42, %39 : vector<8x32xf32>
    %44 = arith.addf %41, %43 : vector<8x32xf32>
    %45 = vector.extract_strided_slice %37 {offsets = [0, 64], sizes = [8, 32], strides = [1, 1]} : vector<8x96xf32> to vector<8x32xf32>
    %46 = math.tanh %44 : vector<8x32xf32>
    %47 = arith.mulf %45, %46 : vector<8x32xf32>
    %c8 = arith.constant 8 : index
    %c0_15 = arith.constant 0 : index
    %48 = vector.load %arg10[%c8, %c0_15] : memref<64x32xf32, #tpu.memory_space<vmem>>, vector<8x32xf32>
    tpu.vector_store %arg10[%c8, %c0_15], %47 {strides = array<i32>} : memref<64x32xf32, #tpu.memory_space<vmem>>, vector<8x32xf32>,
    %49 = vector.extract_strided_slice %5 {offsets = [16, 0], sizes = [8, 128], strides = [1, 1]} : vector<64x128xf32> to vector<8x128xf32>
    %cst_16 = arith.constant dense<0.000000e+00> : vector<8x128xf32>
    %50 = tpu.matmul %47, %6, %cst_16 {dimension_numbers = #tpu.dot_dimension_numbers<[1], [0], [0], [1], [0, 0, 1, 1], [], []>} : vector<8x32xf32>, vector<32x128xf32>, vector<8x128xf32> -> vector<8x128xf32>
    %51 = arith.addf %49, %50 : vector<8x128xf32>
    %52 = vector.extract_strided_slice %51 {offsets = [0, 0], sizes = [8, 96], strides = [1, 1]} : vector<8x128xf32> to vector<8x96xf32>
    %53 = arith.negf %52 : vector<8x96xf32>
    %54 = math.exp %53 : vector<8x96xf32>
    %cst_17 = arith.constant 1.000000e+00 : f32
    %55 = vector.broadcast %cst_17 : f32 to vector<8x96xf32>
    %56 = arith.addf %55, %54 : vector<8x96xf32>
    %57 = arith.divf %55, %56 : vector<8x96xf32>
    %58 = vector.extract_strided_slice %51 {offsets = [0, 96], sizes = [8, 32], strides = [1, 1]} : vector<8x128xf32> to vector<8x32xf32>
    %59 = math.tanh %58 : vector<8x32xf32>
    %60 = vector.extract_strided_slice %57 {offsets = [0, 32], sizes = [8, 32], strides = [1, 1]} : vector<8x96xf32> to vector<8x32xf32>
    %61 = arith.mulf %60, %44 : vector<8x32xf32>
    %62 = vector.extract_strided_slice %57 {offsets = [0, 0], sizes = [8, 32], strides = [1, 1]} : vector<8x96xf32> to vector<8x32xf32>
    %63 = arith.mulf %62, %59 : vector<8x32xf32>
    %64 = arith.addf %61, %63 : vector<8x32xf32>
    %65 = vector.extract_strided_slice %57 {offsets = [0, 64], sizes = [8, 32], strides = [1, 1]} : vector<8x96xf32> to vector<8x32xf32>
    %66 = math.tanh %64 : vector<8x32xf32>
    %67 = arith.mulf %65, %66 : vector<8x32xf32>
    %c16 = arith.constant 16 : index
    %c0_18 = arith.constant 0 : index
    %68 = vector.load %arg10[%c16, %c0_18] : memref<64x32xf32, #tpu.memory_space<vmem>>, vector<8x32xf32>
    tpu.vector_store %arg10[%c16, %c0_18], %67 {strides = array<i32>} : memref<64x32xf32, #tpu.memory_space<vmem>>, vector<8x32xf32>,
    %69 = vector.extract_strided_slice %5 {offsets = [24, 0], sizes = [8, 128], strides = [1, 1]} : vector<64x128xf32> to vector<8x128xf32>
    %cst_19 = arith.constant dense<0.000000e+00> : vector<8x128xf32>
    %70 = tpu.matmul %67, %6, %cst_19 {dimension_numbers = #tpu.dot_dimension_numbers<[1], [0], [0], [1], [0, 0, 1, 1], [], []>} : vector<8x32xf32>, vector<32x128xf32>, vector<8x128xf32> -> vector<8x128xf32>
    %71 = arith.addf %69, %70 : vector<8x128xf32>
    %72 = vector.extract_strided_slice %71 {offsets = [0, 0], sizes = [8, 96], strides = [1, 1]} : vector<8x128xf32> to vector<8x96xf32>
    %73 = arith.negf %72 : vector<8x96xf32>
    %74 = math.exp %73 : vector<8x96xf32>
    %cst_20 = arith.constant 1.000000e+00 : f32
    %75 = vector.broadcast %cst_20 : f32 to vector<8x96xf32>
    %76 = arith.addf %75, %74 : vector<8x96xf32>
    %77 = arith.divf %75, %76 : vector<8x96xf32>
    %78 = vector.extract_strided_slice %71 {offsets = [0, 96], sizes = [8, 32], strides = [1, 1]} : vector<8x128xf32> to vector<8x32xf32>
    %79 = math.tanh %78 : vector<8x32xf32>
    %80 = vector.extract_strided_slice %77 {offsets = [0, 32], sizes = [8, 32], strides = [1, 1]} : vector<8x96xf32> to vector<8x32xf32>
    %81 = arith.mulf %80, %64 : vector<8x32xf32>
    %82 = vector.extract_strided_slice %77 {offsets = [0, 0], sizes = [8, 32], strides = [1, 1]} : vector<8x96xf32> to vector<8x32xf32>
    %83 = arith.mulf %82, %79 : vector<8x32xf32>
    %84 = arith.addf %81, %83 : vector<8x32xf32>
    %85 = vector.extract_strided_slice %77 {offsets = [0, 64], sizes = [8, 32], strides = [1, 1]} : vector<8x96xf32> to vector<8x32xf32>
    %86 = math.tanh %84 : vector<8x32xf32>
    %87 = arith.mulf %85, %86 : vector<8x32xf32>
    %c24 = arith.constant 24 : index
    %c0_21 = arith.constant 0 : index
    %88 = vector.load %arg10[%c24, %c0_21] : memref<64x32xf32, #tpu.memory_space<vmem>>, vector<8x32xf32>
    tpu.vector_store %arg10[%c24, %c0_21], %87 {strides = array<i32>} : memref<64x32xf32, #tpu.memory_space<vmem>>, vector<8x32xf32>,
    %89 = vector.extract_strided_slice %5 {offsets = [32, 0], sizes = [8, 128], strides = [1, 1]} : vector<64x128xf32> to vector<8x128xf32>
    %cst_22 = arith.constant dense<0.000000e+00> : vector<8x128xf32>
    %90 = tpu.matmul %87, %6, %cst_22 {dimension_numbers = #tpu.dot_dimension_numbers<[1], [0], [0], [1], [0, 0, 1, 1], [], []>} : vector<8x32xf32>, vector<32x128xf32>, vector<8x128xf32> -> vector<8x128xf32>
    %91 = arith.addf %89, %90 : vector<8x128xf32>
    %92 = vector.extract_strided_slice %91 {offsets = [0, 0], sizes = [8, 96], strides = [1, 1]} : vector<8x128xf32> to vector<8x96xf32>
    %93 = arith.negf %92 : vector<8x96xf32>
    %94 = math.exp %93 : vector<8x96xf32>
    %cst_23 = arith.constant 1.000000e+00 : f32
    %95 = vector.broadcast %cst_23 : f32 to vector<8x96xf32>
    %96 = arith.addf %95, %94 : vector<8x96xf32>
    %97 = arith.divf %95, %96 : vector<8x96xf32>
    %98 = vector.extract_strided_slice %91 {offsets = [0, 96], sizes = [8, 32], strides = [1, 1]} : vector<8x128xf32> to vector<8x32xf32>
    %99 = math.tanh %98 : vector<8x32xf32>
    %100 = vector.extract_strided_slice %97 {offsets = [0, 32], sizes = [8, 32], strides = [1, 1]} : vector<8x96xf32> to vector<8x32xf32>
    %101 = arith.mulf %100, %84 : vector<8x32xf32>
    %102 = vector.extract_strided_slice %97 {offsets = [0, 0], sizes = [8, 32], strides = [1, 1]} : vector<8x96xf32> to vector<8x32xf32>
    %103 = arith.mulf %102, %99 : vector<8x32xf32>
    %104 = arith.addf %101, %103 : vector<8x32xf32>
    %105 = vector.extract_strided_slice %97 {offsets = [0, 64], sizes = [8, 32], strides = [1, 1]} : vector<8x96xf32> to vector<8x32xf32>
    %106 = math.tanh %104 : vector<8x32xf32>
    %107 = arith.mulf %105, %106 : vector<8x32xf32>
    %c32 = arith.constant 32 : index
    %c0_24 = arith.constant 0 : index
    %108 = vector.load %arg10[%c32, %c0_24] : memref<64x32xf32, #tpu.memory_space<vmem>>, vector<8x32xf32>
    tpu.vector_store %arg10[%c32, %c0_24], %107 {strides = array<i32>} : memref<64x32xf32, #tpu.memory_space<vmem>>, vector<8x32xf32>,
    %109 = vector.extract_strided_slice %5 {offsets = [40, 0], sizes = [8, 128], strides = [1, 1]} : vector<64x128xf32> to vector<8x128xf32>
    %cst_25 = arith.constant dense<0.000000e+00> : vector<8x128xf32>
    %110 = tpu.matmul %107, %6, %cst_25 {dimension_numbers = #tpu.dot_dimension_numbers<[1], [0], [0], [1], [0, 0, 1, 1], [], []>} : vector<8x32xf32>, vector<32x128xf32>, vector<8x128xf32> -> vector<8x128xf32>
    %111 = arith.addf %109, %110 : vector<8x128xf32>
    %112 = vector.extract_strided_slice %111 {offsets = [0, 0], sizes = [8, 96], strides = [1, 1]} : vector<8x128xf32> to vector<8x96xf32>
    %113 = arith.negf %112 : vector<8x96xf32>
    %114 = math.exp %113 : vector<8x96xf32>
    %cst_26 = arith.constant 1.000000e+00 : f32
    %115 = vector.broadcast %cst_26 : f32 to vector<8x96xf32>
    %116 = arith.addf %115, %114 : vector<8x96xf32>
    %117 = arith.divf %115, %116 : vector<8x96xf32>
    %118 = vector.extract_strided_slice %111 {offsets = [0, 96], sizes = [8, 32], strides = [1, 1]} : vector<8x128xf32> to vector<8x32xf32>
    %119 = math.tanh %118 : vector<8x32xf32>
    %120 = vector.extract_strided_slice %117 {offsets = [0, 32], sizes = [8, 32], strides = [1, 1]} : vector<8x96xf32> to vector<8x32xf32>
    %121 = arith.mulf %120, %104 : vector<8x32xf32>
    %122 = vector.extract_strided_slice %117 {offsets = [0, 0], sizes = [8, 32], strides = [1, 1]} : vector<8x96xf32> to vector<8x32xf32>
    %123 = arith.mulf %122, %119 : vector<8x32xf32>
    %124 = arith.addf %121, %123 : vector<8x32xf32>
    %125 = vector.extract_strided_slice %117 {offsets = [0, 64], sizes = [8, 32], strides = [1, 1]} : vector<8x96xf32> to vector<8x32xf32>
    %126 = math.tanh %124 : vector<8x32xf32>
    %127 = arith.mulf %125, %126 : vector<8x32xf32>
    %c40 = arith.constant 40 : index
    %c0_27 = arith.constant 0 : index
    %128 = vector.load %arg10[%c40, %c0_27] : memref<64x32xf32, #tpu.memory_space<vmem>>, vector<8x32xf32>
    tpu.vector_store %arg10[%c40, %c0_27], %127 {strides = array<i32>} : memref<64x32xf32, #tpu.memory_space<vmem>>, vector<8x32xf32>,
    %129 = vector.extract_strided_slice %5 {offsets = [48, 0], sizes = [8, 128], strides = [1, 1]} : vector<64x128xf32> to vector<8x128xf32>
    %cst_28 = arith.constant dense<0.000000e+00> : vector<8x128xf32>
    %130 = tpu.matmul %127, %6, %cst_28 {dimension_numbers = #tpu.dot_dimension_numbers<[1], [0], [0], [1], [0, 0, 1, 1], [], []>} : vector<8x32xf32>, vector<32x128xf32>, vector<8x128xf32> -> vector<8x128xf32>
    %131 = arith.addf %129, %130 : vector<8x128xf32>
    %132 = vector.extract_strided_slice %131 {offsets = [0, 0], sizes = [8, 96], strides = [1, 1]} : vector<8x128xf32> to vector<8x96xf32>
    %133 = arith.negf %132 : vector<8x96xf32>
    %134 = math.exp %133 : vector<8x96xf32>
    %cst_29 = arith.constant 1.000000e+00 : f32
    %135 = vector.broadcast %cst_29 : f32 to vector<8x96xf32>
    %136 = arith.addf %135, %134 : vector<8x96xf32>
    %137 = arith.divf %135, %136 : vector<8x96xf32>
    %138 = vector.extract_strided_slice %131 {offsets = [0, 96], sizes = [8, 32], strides = [1, 1]} : vector<8x128xf32> to vector<8x32xf32>
    %139 = math.tanh %138 : vector<8x32xf32>
    %140 = vector.extract_strided_slice %137 {offsets = [0, 32], sizes = [8, 32], strides = [1, 1]} : vector<8x96xf32> to vector<8x32xf32>
    %141 = arith.mulf %140, %124 : vector<8x32xf32>
    %142 = vector.extract_strided_slice %137 {offsets = [0, 0], sizes = [8, 32], strides = [1, 1]} : vector<8x96xf32> to vector<8x32xf32>
    %143 = arith.mulf %142, %139 : vector<8x32xf32>
    %144 = arith.addf %141, %143 : vector<8x32xf32>
    %145 = vector.extract_strided_slice %137 {offsets = [0, 64], sizes = [8, 32], strides = [1, 1]} : vector<8x96xf32> to vector<8x32xf32>
    %146 = math.tanh %144 : vector<8x32xf32>
    %147 = arith.mulf %145, %146 : vector<8x32xf32>
    %c48 = arith.constant 48 : index
    %c0_30 = arith.constant 0 : index
    %148 = vector.load %arg10[%c48, %c0_30] : memref<64x32xf32, #tpu.memory_space<vmem>>, vector<8x32xf32>
    tpu.vector_store %arg10[%c48, %c0_30], %147 {strides = array<i32>} : memref<64x32xf32, #tpu.memory_space<vmem>>, vector<8x32xf32>,
    %149 = vector.extract_strided_slice %5 {offsets = [56, 0], sizes = [8, 128], strides = [1, 1]} : vector<64x128xf32> to vector<8x128xf32>
    %cst_31 = arith.constant dense<0.000000e+00> : vector<8x128xf32>
    %150 = tpu.matmul %147, %6, %cst_31 {dimension_numbers = #tpu.dot_dimension_numbers<[1], [0], [0], [1], [0, 0, 1, 1], [], []>} : vector<8x32xf32>, vector<32x128xf32>, vector<8x128xf32> -> vector<8x128xf32>
    %151 = arith.addf %149, %150 : vector<8x128xf32>
    %152 = vector.extract_strided_slice %151 {offsets = [0, 0], sizes = [8, 96], strides = [1, 1]} : vector<8x128xf32> to vector<8x96xf32>
    %153 = arith.negf %152 : vector<8x96xf32>
    %154 = math.exp %153 : vector<8x96xf32>
    %cst_32 = arith.constant 1.000000e+00 : f32
    %155 = vector.broadcast %cst_32 : f32 to vector<8x96xf32>
    %156 = arith.addf %155, %154 : vector<8x96xf32>
    %157 = arith.divf %155, %156 : vector<8x96xf32>
    %158 = vector.extract_strided_slice %151 {offsets = [0, 96], sizes = [8, 32], strides = [1, 1]} : vector<8x128xf32> to vector<8x32xf32>
    %159 = math.tanh %158 : vector<8x32xf32>
    %160 = vector.extract_strided_slice %157 {offsets = [0, 32], sizes = [8, 32], strides = [1, 1]} : vector<8x96xf32> to vector<8x32xf32>
    %161 = arith.mulf %160, %144 : vector<8x32xf32>
    %162 = vector.extract_strided_slice %157 {offsets = [0, 0], sizes = [8, 32], strides = [1, 1]} : vector<8x96xf32> to vector<8x32xf32>
    %163 = arith.mulf %162, %159 : vector<8x32xf32>
    %164 = arith.addf %161, %163 : vector<8x32xf32>
    %165 = vector.extract_strided_slice %157 {offsets = [0, 64], sizes = [8, 32], strides = [1, 1]} : vector<8x96xf32> to vector<8x32xf32>
    %166 = math.tanh %164 : vector<8x32xf32>
    %167 = arith.mulf %165, %166 : vector<8x32xf32>
    %c56 = arith.constant 56 : index
    %c0_33 = arith.constant 0 : index
    %168 = vector.load %arg10[%c56, %c0_33] : memref<64x32xf32, #tpu.memory_space<vmem>>, vector<8x32xf32>
    tpu.vector_store %arg10[%c56, %c0_33], %167 {strides = array<i32>} : memref<64x32xf32, #tpu.memory_space<vmem>>, vector<8x32xf32>,
    %c0_34 = arith.constant 0 : index
    %c0_35 = arith.constant 0 : index
    %169 = vector.load %arg10[%c0_34, %c0_35] : memref<64x32xf32, #tpu.memory_space<vmem>>, vector<64x32xf32>
    %c0_36 = arith.constant 0 : index
    %c0_37 = arith.constant 0 : index
    %170 = vector.load %arg4[%c0_36, %c0_37] : memref<32x128xf32, #tpu.memory_space<vmem>>, vector<32x128xf32>
    %cst_38 = arith.constant dense<0.000000e+00> : vector<64x128xf32>
    %171 = tpu.matmul %169, %170, %cst_38 {dimension_numbers = #tpu.dot_dimension_numbers<[1], [0], [0], [1], [0, 0, 1, 1], [], []>} : vector<64x32xf32>, vector<32x128xf32>, vector<64x128xf32> -> vector<64x128xf32>
    %c0_39 = arith.constant 0 : index
    %c0_40 = arith.constant 0 : index
    %172 = vector.load %arg6[%c0_39, %c0_40] : memref<1x128xf32, #tpu.memory_space<vmem>>, vector<1x128xf32>
    %173 = vector.broadcast %172 : vector<1x128xf32> to vector<64x128xf32>
    %174 = arith.addf %171, %173 : vector<64x128xf32>
    %c0_41 = arith.constant 0 : index
    %c0_42 = arith.constant 0 : index
    %175 = vector.load %arg5[%c0_41, %c0_42] : memref<32x128xf32, #tpu.memory_space<vmem>>, vector<32x128xf32>
    %cst_43 = arith.constant 0.000000e+00 : f32
    %176 = vector.broadcast %cst_43 : f32 to vector<8x32xf32>
    %cst_44 = arith.constant 0.000000e+00 : f32
    %177 = vector.broadcast %cst_44 : f32 to vector<8x32xf32>
    %178 = vector.extract_strided_slice %174 {offsets = [0, 0], sizes = [8, 128], strides = [1, 1]} : vector<64x128xf32> to vector<8x128xf32>
    %cst_45 = arith.constant dense<0.000000e+00> : vector<8x128xf32>
    %179 = tpu.matmul %176, %175, %cst_45 {dimension_numbers = #tpu.dot_dimension_numbers<[1], [0], [0], [1], [0, 0, 1, 1], [], []>} : vector<8x32xf32>, vector<32x128xf32>, vector<8x128xf32> -> vector<8x128xf32>
    %180 = arith.addf %178, %179 : vector<8x128xf32>
    %181 = vector.extract_strided_slice %180 {offsets = [0, 0], sizes = [8, 96], strides = [1, 1]} : vector<8x128xf32> to vector<8x96xf32>
    %182 = arith.negf %181 : vector<8x96xf32>
    %183 = math.exp %182 : vector<8x96xf32>
    %cst_46 = arith.constant 1.000000e+00 : f32
    %184 = vector.broadcast %cst_46 : f32 to vector<8x96xf32>
    %185 = arith.addf %184, %183 : vector<8x96xf32>
    %186 = arith.divf %184, %185 : vector<8x96xf32>
    %187 = vector.extract_strided_slice %180 {offsets = [0, 96], sizes = [8, 32], strides = [1, 1]} : vector<8x128xf32> to vector<8x32xf32>
    %188 = math.tanh %187 : vector<8x32xf32>
    %189 = vector.extract_strided_slice %186 {offsets = [0, 32], sizes = [8, 32], strides = [1, 1]} : vector<8x96xf32> to vector<8x32xf32>
    %190 = arith.mulf %189, %177 : vector<8x32xf32>
    %191 = vector.extract_strided_slice %186 {offsets = [0, 0], sizes = [8, 32], strides = [1, 1]} : vector<8x96xf32> to vector<8x32xf32>
    %192 = arith.mulf %191, %188 : vector<8x32xf32>
    %193 = arith.addf %190, %192 : vector<8x32xf32>
    %194 = vector.extract_strided_slice %186 {offsets = [0, 64], sizes = [8, 32], strides = [1, 1]} : vector<8x96xf32> to vector<8x32xf32>
    %195 = math.tanh %193 : vector<8x32xf32>
    %196 = arith.mulf %194, %195 : vector<8x32xf32>
    %c0_47 = arith.constant 0 : index
    %c0_48 = arith.constant 0 : index
    %197 = vector.load %arg10[%c0_47, %c0_48] : memref<64x32xf32, #tpu.memory_space<vmem>>, vector<8x32xf32>
    tpu.vector_store %arg10[%c0_47, %c0_48], %196 {strides = array<i32>} : memref<64x32xf32, #tpu.memory_space<vmem>>, vector<8x32xf32>,
    %198 = vector.extract_strided_slice %174 {offsets = [8, 0], sizes = [8, 128], strides = [1, 1]} : vector<64x128xf32> to vector<8x128xf32>
    %cst_49 = arith.constant dense<0.000000e+00> : vector<8x128xf32>
    %199 = tpu.matmul %196, %175, %cst_49 {dimension_numbers = #tpu.dot_dimension_numbers<[1], [0], [0], [1], [0, 0, 1, 1], [], []>} : vector<8x32xf32>, vector<32x128xf32>, vector<8x128xf32> -> vector<8x128xf32>
    %200 = arith.addf %198, %199 : vector<8x128xf32>
    %201 = vector.extract_strided_slice %200 {offsets = [0, 0], sizes = [8, 96], strides = [1, 1]} : vector<8x128xf32> to vector<8x96xf32>
    %202 = arith.negf %201 : vector<8x96xf32>
    %203 = math.exp %202 : vector<8x96xf32>
    %cst_50 = arith.constant 1.000000e+00 : f32
    %204 = vector.broadcast %cst_50 : f32 to vector<8x96xf32>
    %205 = arith.addf %204, %203 : vector<8x96xf32>
    %206 = arith.divf %204, %205 : vector<8x96xf32>
    %207 = vector.extract_strided_slice %200 {offsets = [0, 96], sizes = [8, 32], strides = [1, 1]} : vector<8x128xf32> to vector<8x32xf32>
    %208 = math.tanh %207 : vector<8x32xf32>
    %209 = vector.extract_strided_slice %206 {offsets = [0, 32], sizes = [8, 32], strides = [1, 1]} : vector<8x96xf32> to vector<8x32xf32>
    %210 = arith.mulf %209, %193 : vector<8x32xf32>
    %211 = vector.extract_strided_slice %206 {offsets = [0, 0], sizes = [8, 32], strides = [1, 1]} : vector<8x96xf32> to vector<8x32xf32>
    %212 = arith.mulf %211, %208 : vector<8x32xf32>
    %213 = arith.addf %210, %212 : vector<8x32xf32>
    %214 = vector.extract_strided_slice %206 {offsets = [0, 64], sizes = [8, 32], strides = [1, 1]} : vector<8x96xf32> to vector<8x32xf32>
    %215 = math.tanh %213 : vector<8x32xf32>
    %216 = arith.mulf %214, %215 : vector<8x32xf32>
    %c8_51 = arith.constant 8 : index
    %c0_52 = arith.constant 0 : index
    %217 = vector.load %arg10[%c8_51, %c0_52] : memref<64x32xf32, #tpu.memory_space<vmem>>, vector<8x32xf32>
    tpu.vector_store %arg10[%c8_51, %c0_52], %216 {strides = array<i32>} : memref<64x32xf32, #tpu.memory_space<vmem>>, vector<8x32xf32>,
    %218 = vector.extract_strided_slice %174 {offsets = [16, 0], sizes = [8, 128], strides = [1, 1]} : vector<64x128xf32> to vector<8x128xf32>
    %cst_53 = arith.constant dense<0.000000e+00> : vector<8x128xf32>
    %219 = tpu.matmul %216, %175, %cst_53 {dimension_numbers = #tpu.dot_dimension_numbers<[1], [0], [0], [1], [0, 0, 1, 1], [], []>} : vector<8x32xf32>, vector<32x128xf32>, vector<8x128xf32> -> vector<8x128xf32>
    %220 = arith.addf %218, %219 : vector<8x128xf32>
    %221 = vector.extract_strided_slice %220 {offsets = [0, 0], sizes = [8, 96], strides = [1, 1]} : vector<8x128xf32> to vector<8x96xf32>
    %222 = arith.negf %221 : vector<8x96xf32>
    %223 = math.exp %222 : vector<8x96xf32>
    %cst_54 = arith.constant 1.000000e+00 : f32
    %224 = vector.broadcast %cst_54 : f32 to vector<8x96xf32>
    %225 = arith.addf %224, %223 : vector<8x96xf32>
    %226 = arith.divf %224, %225 : vector<8x96xf32>
    %227 = vector.extract_strided_slice %220 {offsets = [0, 96], sizes = [8, 32], strides = [1, 1]} : vector<8x128xf32> to vector<8x32xf32>
    %228 = math.tanh %227 : vector<8x32xf32>
    %229 = vector.extract_strided_slice %226 {offsets = [0, 32], sizes = [8, 32], strides = [1, 1]} : vector<8x96xf32> to vector<8x32xf32>
    %230 = arith.mulf %229, %213 : vector<8x32xf32>
    %231 = vector.extract_strided_slice %226 {offsets = [0, 0], sizes = [8, 32], strides = [1, 1]} : vector<8x96xf32> to vector<8x32xf32>
    %232 = arith.mulf %231, %228 : vector<8x32xf32>
    %233 = arith.addf %230, %232 : vector<8x32xf32>
    %234 = vector.extract_strided_slice %226 {offsets = [0, 64], sizes = [8, 32], strides = [1, 1]} : vector<8x96xf32> to vector<8x32xf32>
    %235 = math.tanh %233 : vector<8x32xf32>
    %236 = arith.mulf %234, %235 : vector<8x32xf32>
    %c16_55 = arith.constant 16 : index
    %c0_56 = arith.constant 0 : index
    %237 = vector.load %arg10[%c16_55, %c0_56] : memref<64x32xf32, #tpu.memory_space<vmem>>, vector<8x32xf32>
    tpu.vector_store %arg10[%c16_55, %c0_56], %236 {strides = array<i32>} : memref<64x32xf32, #tpu.memory_space<vmem>>, vector<8x32xf32>,
    %238 = vector.extract_strided_slice %174 {offsets = [24, 0], sizes = [8, 128], strides = [1, 1]} : vector<64x128xf32> to vector<8x128xf32>
    %cst_57 = arith.constant dense<0.000000e+00> : vector<8x128xf32>
    %239 = tpu.matmul %236, %175, %cst_57 {dimension_numbers = #tpu.dot_dimension_numbers<[1], [0], [0], [1], [0, 0, 1, 1], [], []>} : vector<8x32xf32>, vector<32x128xf32>, vector<8x128xf32> -> vector<8x128xf32>
    %240 = arith.addf %238, %239 : vector<8x128xf32>
    %241 = vector.extract_strided_slice %240 {offsets = [0, 0], sizes = [8, 96], strides = [1, 1]} : vector<8x128xf32> to vector<8x96xf32>
    %242 = arith.negf %241 : vector<8x96xf32>
    %243 = math.exp %242 : vector<8x96xf32>
    %cst_58 = arith.constant 1.000000e+00 : f32
    %244 = vector.broadcast %cst_58 : f32 to vector<8x96xf32>
    %245 = arith.addf %244, %243 : vector<8x96xf32>
    %246 = arith.divf %244, %245 : vector<8x96xf32>
    %247 = vector.extract_strided_slice %240 {offsets = [0, 96], sizes = [8, 32], strides = [1, 1]} : vector<8x128xf32> to vector<8x32xf32>
    %248 = math.tanh %247 : vector<8x32xf32>
    %249 = vector.extract_strided_slice %246 {offsets = [0, 32], sizes = [8, 32], strides = [1, 1]} : vector<8x96xf32> to vector<8x32xf32>
    %250 = arith.mulf %249, %233 : vector<8x32xf32>
    %251 = vector.extract_strided_slice %246 {offsets = [0, 0], sizes = [8, 32], strides = [1, 1]} : vector<8x96xf32> to vector<8x32xf32>
    %252 = arith.mulf %251, %248 : vector<8x32xf32>
    %253 = arith.addf %250, %252 : vector<8x32xf32>
    %254 = vector.extract_strided_slice %246 {offsets = [0, 64], sizes = [8, 32], strides = [1, 1]} : vector<8x96xf32> to vector<8x32xf32>
    %255 = math.tanh %253 : vector<8x32xf32>
    %256 = arith.mulf %254, %255 : vector<8x32xf32>
    %c24_59 = arith.constant 24 : index
    %c0_60 = arith.constant 0 : index
    %257 = vector.load %arg10[%c24_59, %c0_60] : memref<64x32xf32, #tpu.memory_space<vmem>>, vector<8x32xf32>
    tpu.vector_store %arg10[%c24_59, %c0_60], %256 {strides = array<i32>} : memref<64x32xf32, #tpu.memory_space<vmem>>, vector<8x32xf32>,
    %258 = vector.extract_strided_slice %174 {offsets = [32, 0], sizes = [8, 128], strides = [1, 1]} : vector<64x128xf32> to vector<8x128xf32>
    %cst_61 = arith.constant dense<0.000000e+00> : vector<8x128xf32>
    %259 = tpu.matmul %256, %175, %cst_61 {dimension_numbers = #tpu.dot_dimension_numbers<[1], [0], [0], [1], [0, 0, 1, 1], [], []>} : vector<8x32xf32>, vector<32x128xf32>, vector<8x128xf32> -> vector<8x128xf32>
    %260 = arith.addf %258, %259 : vector<8x128xf32>
    %261 = vector.extract_strided_slice %260 {offsets = [0, 0], sizes = [8, 96], strides = [1, 1]} : vector<8x128xf32> to vector<8x96xf32>
    %262 = arith.negf %261 : vector<8x96xf32>
    %263 = math.exp %262 : vector<8x96xf32>
    %cst_62 = arith.constant 1.000000e+00 : f32
    %264 = vector.broadcast %cst_62 : f32 to vector<8x96xf32>
    %265 = arith.addf %264, %263 : vector<8x96xf32>
    %266 = arith.divf %264, %265 : vector<8x96xf32>
    %267 = vector.extract_strided_slice %260 {offsets = [0, 96], sizes = [8, 32], strides = [1, 1]} : vector<8x128xf32> to vector<8x32xf32>
    %268 = math.tanh %267 : vector<8x32xf32>
    %269 = vector.extract_strided_slice %266 {offsets = [0, 32], sizes = [8, 32], strides = [1, 1]} : vector<8x96xf32> to vector<8x32xf32>
    %270 = arith.mulf %269, %253 : vector<8x32xf32>
    %271 = vector.extract_strided_slice %266 {offsets = [0, 0], sizes = [8, 32], strides = [1, 1]} : vector<8x96xf32> to vector<8x32xf32>
    %272 = arith.mulf %271, %268 : vector<8x32xf32>
    %273 = arith.addf %270, %272 : vector<8x32xf32>
    %274 = vector.extract_strided_slice %266 {offsets = [0, 64], sizes = [8, 32], strides = [1, 1]} : vector<8x96xf32> to vector<8x32xf32>
    %275 = math.tanh %273 : vector<8x32xf32>
    %276 = arith.mulf %274, %275 : vector<8x32xf32>
    %c32_63 = arith.constant 32 : index
    %c0_64 = arith.constant 0 : index
    %277 = vector.load %arg10[%c32_63, %c0_64] : memref<64x32xf32, #tpu.memory_space<vmem>>, vector<8x32xf32>
    tpu.vector_store %arg10[%c32_63, %c0_64], %276 {strides = array<i32>} : memref<64x32xf32, #tpu.memory_space<vmem>>, vector<8x32xf32>,
    %278 = vector.extract_strided_slice %174 {offsets = [40, 0], sizes = [8, 128], strides = [1, 1]} : vector<64x128xf32> to vector<8x128xf32>
    %cst_65 = arith.constant dense<0.000000e+00> : vector<8x128xf32>
    %279 = tpu.matmul %276, %175, %cst_65 {dimension_numbers = #tpu.dot_dimension_numbers<[1], [0], [0], [1], [0, 0, 1, 1], [], []>} : vector<8x32xf32>, vector<32x128xf32>, vector<8x128xf32> -> vector<8x128xf32>
    %280 = arith.addf %278, %279 : vector<8x128xf32>
    %281 = vector.extract_strided_slice %280 {offsets = [0, 0], sizes = [8, 96], strides = [1, 1]} : vector<8x128xf32> to vector<8x96xf32>
    %282 = arith.negf %281 : vector<8x96xf32>
    %283 = math.exp %282 : vector<8x96xf32>
    %cst_66 = arith.constant 1.000000e+00 : f32
    %284 = vector.broadcast %cst_66 : f32 to vector<8x96xf32>
    %285 = arith.addf %284, %283 : vector<8x96xf32>
    %286 = arith.divf %284, %285 : vector<8x96xf32>
    %287 = vector.extract_strided_slice %280 {offsets = [0, 96], sizes = [8, 32], strides = [1, 1]} : vector<8x128xf32> to vector<8x32xf32>
    %288 = math.tanh %287 : vector<8x32xf32>
    %289 = vector.extract_strided_slice %286 {offsets = [0, 32], sizes = [8, 32], strides = [1, 1]} : vector<8x96xf32> to vector<8x32xf32>
    %290 = arith.mulf %289, %273 : vector<8x32xf32>
    %291 = vector.extract_strided_slice %286 {offsets = [0, 0], sizes = [8, 32], strides = [1, 1]} : vector<8x96xf32> to vector<8x32xf32>
    %292 = arith.mulf %291, %288 : vector<8x32xf32>
    %293 = arith.addf %290, %292 : vector<8x32xf32>
    %294 = vector.extract_strided_slice %286 {offsets = [0, 64], sizes = [8, 32], strides = [1, 1]} : vector<8x96xf32> to vector<8x32xf32>
    %295 = math.tanh %293 : vector<8x32xf32>
    %296 = arith.mulf %294, %295 : vector<8x32xf32>
    %c40_67 = arith.constant 40 : index
    %c0_68 = arith.constant 0 : index
    %297 = vector.load %arg10[%c40_67, %c0_68] : memref<64x32xf32, #tpu.memory_space<vmem>>, vector<8x32xf32>
    tpu.vector_store %arg10[%c40_67, %c0_68], %296 {strides = array<i32>} : memref<64x32xf32, #tpu.memory_space<vmem>>, vector<8x32xf32>,
    %298 = vector.extract_strided_slice %174 {offsets = [48, 0], sizes = [8, 128], strides = [1, 1]} : vector<64x128xf32> to vector<8x128xf32>
    %cst_69 = arith.constant dense<0.000000e+00> : vector<8x128xf32>
    %299 = tpu.matmul %296, %175, %cst_69 {dimension_numbers = #tpu.dot_dimension_numbers<[1], [0], [0], [1], [0, 0, 1, 1], [], []>} : vector<8x32xf32>, vector<32x128xf32>, vector<8x128xf32> -> vector<8x128xf32>
    %300 = arith.addf %298, %299 : vector<8x128xf32>
    %301 = vector.extract_strided_slice %300 {offsets = [0, 0], sizes = [8, 96], strides = [1, 1]} : vector<8x128xf32> to vector<8x96xf32>
    %302 = arith.negf %301 : vector<8x96xf32>
    %303 = math.exp %302 : vector<8x96xf32>
    %cst_70 = arith.constant 1.000000e+00 : f32
    %304 = vector.broadcast %cst_70 : f32 to vector<8x96xf32>
    %305 = arith.addf %304, %303 : vector<8x96xf32>
    %306 = arith.divf %304, %305 : vector<8x96xf32>
    %307 = vector.extract_strided_slice %300 {offsets = [0, 96], sizes = [8, 32], strides = [1, 1]} : vector<8x128xf32> to vector<8x32xf32>
    %308 = math.tanh %307 : vector<8x32xf32>
    %309 = vector.extract_strided_slice %306 {offsets = [0, 32], sizes = [8, 32], strides = [1, 1]} : vector<8x96xf32> to vector<8x32xf32>
    %310 = arith.mulf %309, %293 : vector<8x32xf32>
    %311 = vector.extract_strided_slice %306 {offsets = [0, 0], sizes = [8, 32], strides = [1, 1]} : vector<8x96xf32> to vector<8x32xf32>
    %312 = arith.mulf %311, %308 : vector<8x32xf32>
    %313 = arith.addf %310, %312 : vector<8x32xf32>
    %314 = vector.extract_strided_slice %306 {offsets = [0, 64], sizes = [8, 32], strides = [1, 1]} : vector<8x96xf32> to vector<8x32xf32>
    %315 = math.tanh %313 : vector<8x32xf32>
    %316 = arith.mulf %314, %315 : vector<8x32xf32>
    %c48_71 = arith.constant 48 : index
    %c0_72 = arith.constant 0 : index
    %317 = vector.load %arg10[%c48_71, %c0_72] : memref<64x32xf32, #tpu.memory_space<vmem>>, vector<8x32xf32>
    tpu.vector_store %arg10[%c48_71, %c0_72], %316 {strides = array<i32>} : memref<64x32xf32, #tpu.memory_space<vmem>>, vector<8x32xf32>,
    %318 = vector.extract_strided_slice %174 {offsets = [56, 0], sizes = [8, 128], strides = [1, 1]} : vector<64x128xf32> to vector<8x128xf32>
    %cst_73 = arith.constant dense<0.000000e+00> : vector<8x128xf32>
    %319 = tpu.matmul %316, %175, %cst_73 {dimension_numbers = #tpu.dot_dimension_numbers<[1], [0], [0], [1], [0, 0, 1, 1], [], []>} : vector<8x32xf32>, vector<32x128xf32>, vector<8x128xf32> -> vector<8x128xf32>
    %320 = arith.addf %318, %319 : vector<8x128xf32>
    %321 = vector.extract_strided_slice %320 {offsets = [0, 0], sizes = [8, 96], strides = [1, 1]} : vector<8x128xf32> to vector<8x96xf32>
    %322 = arith.negf %321 : vector<8x96xf32>
    %323 = math.exp %322 : vector<8x96xf32>
    %cst_74 = arith.constant 1.000000e+00 : f32
    %324 = vector.broadcast %cst_74 : f32 to vector<8x96xf32>
    %325 = arith.addf %324, %323 : vector<8x96xf32>
    %326 = arith.divf %324, %325 : vector<8x96xf32>
    %327 = vector.extract_strided_slice %320 {offsets = [0, 96], sizes = [8, 32], strides = [1, 1]} : vector<8x128xf32> to vector<8x32xf32>
    %328 = math.tanh %327 : vector<8x32xf32>
    %329 = vector.extract_strided_slice %326 {offsets = [0, 32], sizes = [8, 32], strides = [1, 1]} : vector<8x96xf32> to vector<8x32xf32>
    %330 = arith.mulf %329, %313 : vector<8x32xf32>
    %331 = vector.extract_strided_slice %326 {offsets = [0, 0], sizes = [8, 32], strides = [1, 1]} : vector<8x96xf32> to vector<8x32xf32>
    %332 = arith.mulf %331, %328 : vector<8x32xf32>
    %333 = arith.addf %330, %332 : vector<8x32xf32>
    %334 = vector.extract_strided_slice %326 {offsets = [0, 64], sizes = [8, 32], strides = [1, 1]} : vector<8x96xf32> to vector<8x32xf32>
    %335 = math.tanh %333 : vector<8x32xf32>
    %336 = arith.mulf %334, %335 : vector<8x32xf32>
    %c56_75 = arith.constant 56 : index
    %c0_76 = arith.constant 0 : index
    %337 = vector.load %arg10[%c56_75, %c0_76] : memref<64x32xf32, #tpu.memory_space<vmem>>, vector<8x32xf32>
    tpu.vector_store %arg10[%c56_75, %c0_76], %336 {strides = array<i32>} : memref<64x32xf32, #tpu.memory_space<vmem>>, vector<8x32xf32>,
    %c0_77 = arith.constant 0 : index
    %c0_78 = arith.constant 0 : index
    %338 = vector.load %arg10[%c0_77, %c0_78] : memref<64x32xf32, #tpu.memory_space<vmem>>, vector<64x32xf32>
    %339 = vector.extract_strided_slice %338 {offsets = [56, 0], sizes = [8, 32], strides = [1, 1]} : vector<64x32xf32> to vector<8x32xf32>
    %c0_79 = arith.constant 0 : index
    %c0_80 = arith.constant 0 : index
    %340 = vector.load %arg7[%c0_79, %c0_80] : memref<32x1xf32, #tpu.memory_space<vmem>>, vector<32x1xf32>
    %cst_81 = arith.constant dense<0.000000e+00> : vector<8x1xf32>
    %341 = tpu.matmul %339, %340, %cst_81 {dimension_numbers = #tpu.dot_dimension_numbers<[1], [0], [0], [1], [0, 0, 1, 1], [], []>} : vector<8x32xf32>, vector<32x1xf32>, vector<8x1xf32> -> vector<8x1xf32>
    %c0_82 = arith.constant 0 : index
    %c0_83 = arith.constant 0 : index
    %342 = vector.load %arg8[%c0_82, %c0_83] : memref<1x1xf32, #tpu.memory_space<vmem>>, vector<1x1xf32>
    %343 = vector.broadcast %342 : vector<1x1xf32> to vector<8x1xf32>
    %344 = arith.addf %341, %343 : vector<8x1xf32>
    %c0_84 = arith.constant 0 : index
    %c0_85 = arith.constant 0 : index
    %345 = vector.load %arg9[%c0_84, %c0_85] : memref<8x1xf32, #tpu.memory_space<vmem>>, vector<8x1xf32>
    tpu.vector_store %arg9[%c0_84, %c0_85], %344 {strides = array<i32>} : memref<8x1xf32, #tpu.memory_space<vmem>>, vector<8x1xf32>,
    return
  }
}

</mosaic_0001>

<llo_original>
// kernel: tpu_custom_call.1
$region0: #{tpu_custom_call.1}
  #allocation0 [shape = 'u32[]', space=smem, size = 0x4, offset = 0x4, fixed_abs, tag = 'smem constant byte address 0x4 - core index']
  #allocation1 [shape = 'u32[144,128]{1,0:T(1,128)}', space=vmem, size = 0x12000, scoped, tag = 'internal scratch']
  #allocation2 [shape = 'f32[64,32]{1,0:T(8,128)}', space=vmem, size = 0x8000, scoped, tag = 'scratch operand']
  #allocation3 [shape = 'f32[1,1]{1,0:T(1,128)S(1)}', space=vmem, size = 0x200, scoped, tag = 'scoped memory for tpu_custom_call.1']
  %s0 = inlined_call_operand.vmem [shape: f32[64,4], index: 0, kind: input, shape index: {}]
  %s1 = inlined_call_operand.vmem [shape: f32[4,128], index: 1, kind: input, shape index: {}]
  %s2 = inlined_call_operand.vmem [shape: f32[32,128], index: 2, kind: input, shape index: {}]
  %s3 = inlined_call_operand.vmem [shape: f32[1,128], index: 3, kind: input, shape index: {}]
  %s4 = inlined_call_operand.vmem [shape: f32[32,128], index: 4, kind: input, shape index: {}]
  %s5 = inlined_call_operand.vmem [shape: f32[32,128], index: 5, kind: input, shape index: {}]
  %s6 = inlined_call_operand.vmem [shape: f32[1,128], index: 6, kind: input, shape index: {}]
  %s7 = inlined_call_operand.vmem [shape: f32[32,1], index: 7, kind: input, shape index: {}]
  %s8 = inlined_call_operand.<no memory space> [shape: f32[1,1], index: 8, kind: input, shape index: {}]
  %s9 = inlined_call_operand.vmem [shape: f32[8,1], index: 9, kind: output, shape index: {}]
  %s10 = sld [smem:[#allocation0]]
  $region46: #{tpu_custom_call.1} parent=0
    _
  %s12 = ssub.s32 1, %s10
  %s13 = scalar_select 0, %s12, %s10
  %v14 = vstv %s8
  %15 = vst [vmem:[#allocation3] sm:$0x1] %v14
  // Predicated region
  $region2: #{tpu_custom_call.1} parent=0 // pred_check
    _
  $region3: #{tpu_custom_call.1} parent=0 // pred_check_branch
    %17 = sbr.rel (0) target = $region5
  $region4: #{tpu_custom_call.1} parent=0 // pred_region
    _
  $region5: #{tpu_custom_call.1} parent=0 // pred_fallthru
    _
  // Predicated region
  $region6: #{tpu_custom_call.1} parent=0 // pred_check
    _
  $region7: #{tpu_custom_call.1} parent=0 // pred_check_branch
    %19 = sbr.rel (0) target = $region9
  $region8: #{tpu_custom_call.1} parent=0 // pred_region
    _
  $region9: #{tpu_custom_call.1} parent=0 // pred_fallthru
    _
  // Predicated region
  $region10: #{tpu_custom_call.1} parent=0 // pred_check
    _
  $region11: #{tpu_custom_call.1} parent=0 // pred_check_branch
    %21 = sbr.rel (0) target = $region13
  $region12: #{tpu_custom_call.1} parent=0 // pred_region
    _
  $region13: #{tpu_custom_call.1} parent=0 // pred_fallthru
    _
  // Predicated region
  $region14: #{tpu_custom_call.1} parent=0 // pred_check
    _
  $region15: #{tpu_custom_call.1} parent=0 // pred_check_branch
    %23 = sbr.rel (0) target = $region17
  $region16: #{tpu_custom_call.1} parent=0 // pred_region
    _
  $region17: #{tpu_custom_call.1} parent=0 // pred_fallthru
    _
  // Predicated region
  $region18: #{tpu_custom_call.1} parent=0 // pred_check
    _
  $region19: #{tpu_custom_call.1} parent=0 // pred_check_branch
    %25 = sbr.rel (0) target = $region21
  $region20: #{tpu_custom_call.1} parent=0 // pred_region
    _
  $region21: #{tpu_custom_call.1} parent=0 // pred_fallthru
    _
  // Predicated region
  $region22: #{tpu_custom_call.1} parent=0 // pred_check
    _
  $region23: #{tpu_custom_call.1} parent=0 // pred_check_branch
    %27 = sbr.rel (0) target = $region25
  $region24: #{tpu_custom_call.1} parent=0 // pred_region
    _
  $region25: #{tpu_custom_call.1} parent=0 // pred_fallthru
    _
  // Predicated region
  $region26: #{tpu_custom_call.1} parent=0 // pred_check
    _
  $region27: #{tpu_custom_call.1} parent=0 // pred_check_branch
    %29 = sbr.rel (0) target = $region29
  $region28: #{tpu_custom_call.1} parent=0 // pred_region
    _
  $region29: #{tpu_custom_call.1} parent=0 // pred_fallthru
    _
  // Predicated region
  $region30: #{tpu_custom_call.1} parent=0 // pred_check
    _
  $region31: #{tpu_custom_call.1} parent=0 // pred_check_branch
    %31 = sbr.rel (0) target = $region33
  $region32: #{tpu_custom_call.1} parent=0 // pred_region
    _
  $region33: #{tpu_custom_call.1} parent=0 // pred_fallthru
    _
  // Predicated region
  $region34: #{tpu_custom_call.1} parent=0 // pred_check
    _
  $region35: #{tpu_custom_call.1} parent=0 // pred_check_branch
    %33 = sbr.rel (0) target = $region37
  $region36: #{tpu_custom_call.1} parent=0 // pred_region
    _
  $region37: #{tpu_custom_call.1} parent=0 // pred_fallthru
    _
  %v34 = vld [vmem:[%s0] sm:$0xff]
  %v35 = vld [vmem:[%s0 + $0x8] sm:$0xff]
  %v36 = vld [vmem:[%s0 + $0x10] sm:$0xff]
  %v37 = vld [vmem:[%s0 + $0x18] sm:$0xff]
  %v38 = vld [vmem:[%s0 + $0x20] sm:$0xff]
  %v39 = vld [vmem:[%s0 + $0x28] sm:$0xff]
  %v40 = vld [vmem:[%s0 + $0x30] sm:$0xff]
  %v41 = vld [vmem:[%s0 + $0x38] sm:$0xff]
  %v42 = vld [vmem:[%s1] sm:$0xf]
  %v43 = vld [vmem:[%s3] sm:$0x1]
  %v45 = vlaneseq
  %v46 = vshrl.u32 %v45, 7
  %v47 = vsub.s32 0, %v46
  %v48 = vrot.slane %v43, %v47
  %vm50 = vcmask 31744
  %v52 = vsel %vm50, %v34, 0
  %v55 = vsel %vm50, %v35, 0
  %v58 = vsel %vm50, %v36, 0
  %v61 = vsel %vm50, %v37, 0
  %v64 = vsel %vm50, %v38, 0
  %v67 = vsel %vm50, %v39, 0
  %v70 = vsel %vm50, %v40, 0
  %v73 = vsel %vm50, %v41, 0
  %vm75 = vcmask 1043456
  %v77 = vsel %vm75, %v42, 0
  %79 = vmatprep.subr.mxu0 0.0
  %80 = vmatpush1.msra.mxu0 0.0
  %81 = vmatprep.subr.mxu0 0.0
  %82 = vmatpush1.msra.mxu0 0.0
  %83 = vmatprep.subr.mxu0 0.0
  %84 = vmatpush1.msra.mxu0 0.0
  %85 = vmatprep.subr.mxu0 0.0
  %86 = vmatpush1.msra.mxu0 0.0
  %87 = vmatprep.subr.mxu0 0.0
  %88 = vmatpush1.msra.mxu0 0.0
  %89 = vmatprep.subr.mxu0 0.0
  %90 = vmatpush1.msra.mxu0 0.0
  %91 = vmatprep.subr.mxu0 0.0
  %92 = vmatpush1.msra.mxu0 0.0
  %93 = vmatprep.subr.mxu0 0.0
  %94 = vmatpush1.msra.mxu0 0.0
  %95 = vmatprep.subr.mxu0 0.0
  %96 = vmatpush1.msra.mxu0 0.0
  %97 = vmatprep.subr.mxu0 0.0
  %98 = vmatpush1.msra.mxu0 0.0
  %99 = vmatprep.subr.mxu0 0.0
  %100 = vmatpush1.msra.mxu0 0.0
  %101 = vmatprep.subr.mxu0 0.0
  %102 = vmatpush1.msra.mxu0 0.0
  %103 = vmatprep.subr.mxu0 0.0
  %104 = vmatpush1.msra.mxu0 0.0
  %105 = vmatprep.subr.mxu0 0.0
  %106 = vmatpush1.msra.mxu0 0.0
  %107 = vmatprep.subr.mxu0 0.0
  %108 = vmatpush1.msra.mxu0 0.0
  %109 = vmatprep.subr.mxu0 0.0
  %110 = vmatpush1.msra.mxu0 %v77
  %111 = vmatprep.subr.mxu0 0.0
  %112 = vmatpush2.msra.mxu0 0.0
  %113 = vmatprep.subr.mxu0 0.0
  %114 = vmatpush2.msra.mxu0 0.0
  %115 = vmatprep.subr.mxu0 0.0
  %116 = vmatpush2.msra.mxu0 0.0
  %117 = vmatprep.subr.mxu0 0.0
  %118 = vmatpush2.msra.mxu0 0.0
  %119 = vmatprep.subr.mxu0 0.0
  %120 = vmatpush2.msra.mxu0 0.0
  %121 = vmatprep.subr.mxu0 0.0
  %122 = vmatpush2.msra.mxu0 0.0
  %123 = vmatprep.subr.mxu0 0.0
  %124 = vmatpush2.msra.mxu0 0.0
  %125 = vmatprep.subr.mxu0 0.0
  %126 = vmatpush2.msra.mxu0 0.0
  %127 = vmatprep.subr.mxu0 0.0
  %128 = vmatpush2.msra.mxu0 0.0
  %129 = vmatprep.subr.mxu0 0.0
  %130 = vmatpush2.msra.mxu0 0.0
  %131 = vmatprep.subr.mxu0 0.0
  %132 = vmatpush2.msra.mxu0 0.0
  %133 = vmatprep.subr.mxu0 0.0
  %134 = vmatpush2.msra.mxu0 0.0
  %135 = vmatprep.subr.mxu0 0.0
  %136 = vmatpush2.msra.mxu0 0.0
  %137 = vmatprep.subr.mxu0 0.0
  %138 = vmatpush2.msra.mxu0 0.0
  %139 = vmatprep.subr.mxu0 0.0
  %140 = vmatpush2.msra.mxu0 0.0
  %141 = vmatprep.subr.mxu0 0.0
  %142 = vmatpush2.msra.mxu0 0.0
  %143 = vmatprep.mubr.f32.mxu0 0.0
  %144 = vmatmul.mubr.f32.gmra.mxu0 %v52
  %v145 = vpop.f32.mrf.mxu0
  %v146 = vadd.f32 %v48, %v145
  %v147 = vpop.f32.mrf.mxu0
  %148 = vmatprep.mubr.f32.mxu0 0.0
  %149 = vmatmul.mubr.f32.gmra.mxu0 %v55
  %v150 = vpop.f32.mrf.mxu0
  %v151 = vadd.f32 %v48, %v150
  %v152 = vpop.f32.mrf.mxu0
  %153 = vmatprep.mubr.f32.mxu0 0.0
  %154 = vmatmul.mubr.f32.gmra.mxu0 %v58
  %v155 = vpop.f32.mrf.mxu0
  %v156 = vadd.f32 %v48, %v155
  %v157 = vpop.f32.mrf.mxu0
  %158 = vmatprep.mubr.f32.mxu0 0.0
  %159 = vmatmul.mubr.f32.gmra.mxu0 %v61
  %v160 = vpop.f32.mrf.mxu0
  %v161 = vadd.f32 %v48, %v160
  %v162 = vpop.f32.mrf.mxu0
  %163 = vmatprep.mubr.f32.mxu0 0.0
  %164 = vmatmul.mubr.f32.gmra.mxu0 %v64
  %v165 = vpop.f32.mrf.mxu0
  %v166 = vadd.f32 %v48, %v165
  %v167 = vpop.f32.mrf.mxu0
  %168 = vmatprep.mubr.f32.mxu0 0.0
  %169 = vmatmul.mubr.f32.gmra.mxu0 %v67
  %v170 = vpop.f32.mrf.mxu0
  %v171 = vadd.f32 %v48, %v170
  %v172 = vpop.f32.mrf.mxu0
  %173 = vmatprep.mubr.f32.mxu0 0.0
  %174 = vmatmul.mubr.f32.gmra.mxu0 %v70
  %v175 = vpop.f32.mrf.mxu0
  %v176 = vadd.f32 %v48, %v175
  %v177 = vpop.f32.mrf.mxu0
  %178 = vmatprep.mubr.f32.mxu0 0.0
  %179 = vmatmul.mubr.f32.gmra.mxu0 %v73
  %v180 = vpop.f32.mrf.mxu0
  %v181 = vadd.f32 %v48, %v180
  %v182 = vpop.f32.mrf.mxu0
  %183 = vdwg.mxu0
  %v184 = vld [vmem:[%s2] sm:$0xff]
  %v185 = vld [vmem:[%s2 + $0x8] sm:$0xff]
  %v186 = vld [vmem:[%s2 + $0x10] sm:$0xff]
  %v187 = vld [vmem:[%s2 + $0x18] sm:$0xff]
  %vm188 = vcmask 261120
  %v190 = vsel %vm188, 0.0, 0
  %192 = vmatprep.subr.mxu0 0.0
  %193 = vmatpush1.msra.mxu0 0.0
  %194 = vmatprep.subr.mxu0 0.0
  %195 = vmatpush1.msra.mxu0 0.0
  %196 = vmatprep.subr.mxu0 0.0
  %197 = vmatpush1.msra.mxu0 0.0
  %198 = vmatprep.subr.mxu0 0.0
  %199 = vmatpush1.msra.mxu0 0.0
  %200 = vmatprep.subr.mxu0 0.0
  %201 = vmatpush1.msra.mxu0 0.0
  %202 = vmatprep.subr.mxu0 0.0
  %203 = vmatpush1.msra.mxu0 0.0
  %204 = vmatprep.subr.mxu0 0.0
  %205 = vmatpush1.msra.mxu0 0.0
  %206 = vmatprep.subr.mxu0 0.0
  %207 = vmatpush1.msra.mxu0 0.0
  %208 = vmatprep.subr.mxu0 0.0
  %209 = vmatpush1.msra.mxu0 0.0
  %210 = vmatprep.subr.mxu0 0.0
  %211 = vmatpush1.msra.mxu0 0.0
  %212 = vmatprep.subr.mxu0 0.0
  %213 = vmatpush1.msra.mxu0 0.0
  %214 = vmatprep.subr.mxu0 0.0
  %215 = vmatpush1.msra.mxu0 0.0
  %216 = vmatprep.subr.mxu0 0.0
  %217 = vmatpush1.msra.mxu0 %v187
  %218 = vmatprep.subr.mxu0 0.0
  %219 = vmatpush1.msra.mxu0 %v186
  %220 = vmatprep.subr.mxu0 0.0
  %221 = vmatpush1.msra.mxu0 %v185
  %222 = vmatprep.subr.mxu0 0.0
  %223 = vmatpush1.msra.mxu0 %v184
  %224 = vmatprep.subr.mxu0 0.0
  %225 = vmatpush2.msra.mxu0 0.0
  %226 = vmatprep.subr.mxu0 0.0
  %227 = vmatpush2.msra.mxu0 0.0
  %228 = vmatprep.subr.mxu0 0.0
  %229 = vmatpush2.msra.mxu0 0.0
  %230 = vmatprep.subr.mxu0 0.0
  %231 = vmatpush2.msra.mxu0 0.0
  %232 = vmatprep.subr.mxu0 0.0
  %233 = vmatpush2.msra.mxu0 0.0
  %234 = vmatprep.subr.mxu0 0.0
  %235 = vmatpush2.msra.mxu0 0.0
  %236 = vmatprep.subr.mxu0 0.0
  %237 = vmatpush2.msra.mxu0 0.0
  %238 = vmatprep.subr.mxu0 0.0
  %239 = vmatpush2.msra.mxu0 0.0
  %240 = vmatprep.subr.mxu0 0.0
  %241 = vmatpush2.msra.mxu0 0.0
  %242 = vmatprep.subr.mxu0 0.0
  %243 = vmatpush2.msra.mxu0 0.0
  %244 = vmatprep.subr.mxu0 0.0
  %245 = vmatpush2.msra.mxu0 0.0
  %246 = vmatprep.subr.mxu0 0.0
  %247 = vmatpush2.msra.mxu0 0.0
  %248 = vmatprep.subr.mxu0 0.0
  %249 = vmatpush2.msra.mxu0 0.0
  %250 = vmatprep.subr.mxu0 0.0
  %251 = vmatpush2.msra.mxu0 0.0
  %252 = vmatprep.subr.mxu0 0.0
  %253 = vmatpush2.msra.mxu0 0.0
  %254 = vmatprep.subr.mxu0 0.0
  %255 = vmatpush2.msra.mxu0 0.0
  %256 = vmatprep.mubr.f32.mxu0 0.0
  %257 = vmatmul.mubr.f32.gmra.mxu0 %v190
  %v258 = vpop.f32.mrf.mxu0
  %v259 = vadd.f32 0.0, %v258
  %v260 = vpop.f32.mrf.mxu0
  %261 = vdwg.mxu0
  %v262 = vadd.f32 %v146, %v259
  %v263 = vxor.u32 %v262, 2147483648
  %v264 = vmul.f32 %v263, 1.442695
  %v265 = vpow.pop %v264
  %v266 = vadd.f32 %v265, 1.0
  %v267 = vrcp.pop %v266
  %v268 = vmul.f32 1.0, %v267
  %v269 = vtanh.pop %v262
  %v270 = vmul.f32 %v268, 0.0
  %272 = vrot.lane.b32.xlu0 %v269, 32
  %v273 = vpop.permute.xlu0 %272
  %v275 = vmul.f32 %v268, %v273
  %277 = vrot.lane.b32.xlu0 %v275, 32
  %v278 = vpop.permute.xlu0 %277
  %v280 = vadd.f32 %v270, %v278
  %v281 = vtanh.pop %v280
  %283 = vrot.lane.b32.xlu0 %v281, 32
  %v284 = vpop.permute.xlu0 %283
  %v286 = vmul.f32 %v268, %v284
  %288 = vrot.lane.b32.xlu0 %v286, 64
  %v289 = vpop.permute.xlu0 %288
  %291 = vst.msk [vmem:[#allocation2] sm:$0xff] %vm188, %v289
  %v292 = vsel %vm188, %v289, 0
  %294 = vmatprep.subr.mxu0 0.0
  %295 = vmatpush1.msra.mxu0 0.0
  %296 = vmatprep.subr.mxu0 0.0
  %297 = vmatpush1.msra.mxu0 0.0
  %298 = vmatprep.subr.mxu0 0.0
  %299 = vmatpush1.msra.mxu0 0.0
  %300 = vmatprep.subr.mxu0 0.0
  %301 = vmatpush1.msra.mxu0 0.0
  %302 = vmatprep.subr.mxu0 0.0
  %303 = vmatpush1.msra.mxu0 0.0
  %304 = vmatprep.subr.mxu0 0.0
  %305 = vmatpush1.msra.mxu0 0.0
  %306 = vmatprep.subr.mxu0 0.0
  %307 = vmatpush1.msra.mxu0 0.0
  %308 = vmatprep.subr.mxu0 0.0
  %309 = vmatpush1.msra.mxu0 0.0
  %310 = vmatprep.subr.mxu0 0.0
  %311 = vmatpush1.msra.mxu0 0.0
  %312 = vmatprep.subr.mxu0 0.0
  %313 = vmatpush1.msra.mxu0 0.0
  %314 = vmatprep.subr.mxu0 0.0
  %315 = vmatpush1.msra.mxu0 0.0
  %316 = vmatprep.subr.mxu0 0.0
  %317 = vmatpush1.msra.mxu0 0.0
  %318 = vmatprep.subr.mxu0 0.0
  %319 = vmatpush1.msra.mxu0 %v187
  %320 = vmatprep.subr.mxu0 0.0
  %321 = vmatpush1.msra.mxu0 %v186
  %322 = vmatprep.subr.mxu0 0.0
  %323 = vmatpush1.msra.mxu0 %v185
  %324 = vmatprep.subr.mxu0 0.0
  %325 = vmatpush1.msra.mxu0 %v184
  %326 = vmatprep.subr.mxu0 0.0
  %327 = vmatpush2.msra.mxu0 0.0
  %328 = vmatprep.subr.mxu0 0.0
  %329 = vmatpush2.msra.mxu0 0.0
  %330 = vmatprep.subr.mxu0 0.0
  %331 = vmatpush2.msra.mxu0 0.0
  %332 = vmatprep.subr.mxu0 0.0
  %333 = vmatpush2.msra.mxu0 0.0
  %334 = vmatprep.subr.mxu0 0.0
  %335 = vmatpush2.msra.mxu0 0.0
  %336 = vmatprep.subr.mxu0 0.0
  %337 = vmatpush2.msra.mxu0 0.0
  %338 = vmatprep.subr.mxu0 0.0
  %339 = vmatpush2.msra.mxu0 0.0
  %340 = vmatprep.subr.mxu0 0.0
  %341 = vmatpush2.msra.mxu0 0.0
  %342 = vmatprep.subr.mxu0 0.0
  %343 = vmatpush2.msra.mxu0 0.0
  %344 = vmatprep.subr.mxu0 0.0
  %345 = vmatpush2.msra.mxu0 0.0
  %346 = vmatprep.subr.mxu0 0.0
  %347 = vmatpush2.msra.mxu0 0.0
  %348 = vmatprep.subr.mxu0 0.0
  %349 = vmatpush2.msra.mxu0 0.0
  %350 = vmatprep.subr.mxu0 0.0
  %351 = vmatpush2.msra.mxu0 0.0
  %352 = vmatprep.subr.mxu0 0.0
  %353 = vmatpush2.msra.mxu0 0.0
  %354 = vmatprep.subr.mxu0 0.0
  %355 = vmatpush2.msra.mxu0 0.0
  %356 = vmatprep.subr.mxu0 0.0
  %357 = vmatpush2.msra.mxu0 0.0
  %358 = vmatprep.mubr.f32.mxu0 0.0
  %359 = vmatmul.mubr.f32.gmra.mxu0 %v292
  %v360 = vpop.f32.mrf.mxu0
  %v361 = vadd.f32 0.0, %v360
  %v362 = vpop.f32.mrf.mxu0
  %363 = vdwg.mxu0
  %v364 = vadd.f32 %v151, %v361
  %v365 = vxor.u32 %v364, 2147483648
  %v366 = vmul.f32 %v365, 1.442695
  %v367 = vpow.pop %v366
  %v368 = vadd.f32 %v367, 1.0
  %v369 = vrcp.pop %v368
  %v370 = vmul.f32 1.0, %v369
  %v371 = vtanh.pop %v364
  %v372 = vmul.f32 %v370, %v280
  %374 = vrot.lane.b32.xlu0 %v371, 32
  %v375 = vpop.permute.xlu0 %374
  %v377 = vmul.f32 %v370, %v375
  %379 = vrot.lane.b32.xlu0 %v377, 32
  %v380 = vpop.permute.xlu0 %379
  %v382 = vadd.f32 %v372, %v380
  %v383 = vtanh.pop %v382
  %385 = vrot.lane.b32.xlu0 %v383, 32
  %v386 = vpop.permute.xlu0 %385
  %v388 = vmul.f32 %v370, %v386
  %390 = vrot.lane.b32.xlu0 %v388, 64
  %v391 = vpop.permute.xlu0 %390
  %393 = vst.msk [vmem:[#allocation2 + $0x8] sm:$0xff] %vm188, %v391
  %v394 = vsel %vm188, %v391, 0
  %396 = vmatprep.subr.mxu0 0.0
  %397 = vmatpush1.msra.mxu0 0.0
  %398 = vmatprep.subr.mxu0 0.0
  %399 = vmatpush1.msra.mxu0 0.0
  %400 = vmatprep.subr.mxu0 0.0
  %401 = vmatpush1.msra.mxu0 0.0
  %402 = vmatprep.subr.mxu0 0.0
  %403 = vmatpush1.msra.mxu0 0.0
  %404 = vmatprep.subr.mxu0 0.0
  %405 = vmatpush1.msra.mxu0 0.0
  %406 = vmatprep.subr.mxu0 0.0
  %407 = vmatpush1.msra.mxu0 0.0
  %408 = vmatprep.subr.mxu0 0.0
  %409 = vmatpush1.msra.mxu0 0.0
  %410 = vmatprep.subr.mxu0 0.0
  %411 = vmatpush1.msra.mxu0 0.0
  %412 = vmatprep.subr.mxu0 0.0
  %413 = vmatpush1.msra.mxu0 0.0
  %414 = vmatprep.subr.mxu0 0.0
  %415 = vmatpush1.msra.mxu0 0.0
  %416 = vmatprep.subr.mxu0 0.0
  %417 = vmatpush1.msra.mxu0 0.0
  %418 = vmatprep.subr.mxu0 0.0
  %419 = vmatpush1.msra.mxu0 0.0
  %420 = vmatprep.subr.mxu0 0.0
  %421 = vmatpush1.msra.mxu0 %v187
  %422 = vmatprep.subr.mxu0 0.0
  %423 = vmatpush1.msra.mxu0 %v186
  %424 = vmatprep.subr.mxu0 0.0
  %425 = vmatpush1.msra.mxu0 %v185
  %426 = vmatprep.subr.mxu0 0.0
  %427 = vmatpush1.msra.mxu0 %v184
  %428 = vmatprep.subr.mxu0 0.0
  %429 = vmatpush2.msra.mxu0 0.0
  %430 = vmatprep.subr.mxu0 0.0
  %431 = vmatpush2.msra.mxu0 0.0
  %432 = vmatprep.subr.mxu0 0.0
  %433 = vmatpush2.msra.mxu0 0.0
  %434 = vmatprep.subr.mxu0 0.0
  %435 = vmatpush2.msra.mxu0 0.0
  %436 = vmatprep.subr.mxu0 0.0
  %437 = vmatpush2.msra.mxu0 0.0
  %438 = vmatprep.subr.mxu0 0.0
  %439 = vmatpush2.msra.mxu0 0.0
  %440 = vmatprep.subr.mxu0 0.0
  %441 = vmatpush2.msra.mxu0 0.0
  %442 = vmatprep.subr.mxu0 0.0
  %443 = vmatpush2.msra.mxu0 0.0
  %444 = vmatprep.subr.mxu0 0.0
  %445 = vmatpush2.msra.mxu0 0.0
  %446 = vmatprep.subr.mxu0 0.0
  %447 = vmatpush2.msra.mxu0 0.0
  %448 = vmatprep.subr.mxu0 0.0
  %449 = vmatpush2.msra.mxu0 0.0
  %450 = vmatprep.subr.mxu0 0.0
  %451 = vmatpush2.msra.mxu0 0.0
  %452 = vmatprep.subr.mxu0 0.0
  %453 = vmatpush2.msra.mxu0 0.0
  %454 = vmatprep.subr.mxu0 0.0
  %455 = vmatpush2.msra.mxu0 0.0
  %456 = vmatprep.subr.mxu0 0.0
  %457 = vmatpush2.msra.mxu0 0.0
  %458 = vmatprep.subr.mxu0 0.0
  %459 = vmatpush2.msra.mxu0 0.0
  %460 = vmatprep.mubr.f32.mxu0 0.0
  %461 = vmatmul.mubr.f32.gmra.mxu0 %v394
  %v462 = vpop.f32.mrf.mxu0
  %v463 = vadd.f32 0.0, %v462
  %v464 = vpop.f32.mrf.mxu0
  %465 = vdwg.mxu0
  %v466 = vadd.f32 %v156, %v463
  %v467 = vxor.u32 %v466, 2147483648
  %v468 = vmul.f32 %v467, 1.442695
  %v469 = vpow.pop %v468
  %v470 = vadd.f32 %v469, 1.0
  %v471 = vrcp.pop %v470
  %v472 = vmul.f32 1.0, %v471
  %v473 = vtanh.pop %v466
  %v474 = vmul.f32 %v472, %v382
  %476 = vrot.lane.b32.xlu0 %v473, 32
  %v477 = vpop.permute.xlu0 %476
  %v479 = vmul.f32 %v472, %v477
  %481 = vrot.lane.b32.xlu0 %v479, 32
  %v482 = vpop.permute.xlu0 %481
  %v484 = vadd.f32 %v474, %v482
  %v485 = vtanh.pop %v484
  %487 = vrot.lane.b32.xlu0 %v485, 32
  %v488 = vpop.permute.xlu0 %487
  %v490 = vmul.f32 %v472, %v488
  %492 = vrot.lane.b32.xlu0 %v490, 64
  %v493 = vpop.permute.xlu0 %492
  %495 = vst.msk [vmem:[#allocation2 + $0x10] sm:$0xff] %vm188, %v493
  %v496 = vsel %vm188, %v493, 0
  %498 = vmatprep.subr.mxu0 0.0
  %499 = vmatpush1.msra.mxu0 0.0
  %500 = vmatprep.subr.mxu0 0.0
  %501 = vmatpush1.msra.mxu0 0.0
  %502 = vmatprep.subr.mxu0 0.0
  %503 = vmatpush1.msra.mxu0 0.0
  %504 = vmatprep.subr.mxu0 0.0
  %505 = vmatpush1.msra.mxu0 0.0
  %506 = vmatprep.subr.mxu0 0.0
  %507 = vmatpush1.msra.mxu0 0.0
  %508 = vmatprep.subr.mxu0 0.0
  %509 = vmatpush1.msra.mxu0 0.0
  %510 = vmatprep.subr.mxu0 0.0
  %511 = vmatpush1.msra.mxu0 0.0
  %512 = vmatprep.subr.mxu0 0.0
  %513 = vmatpush1.msra.mxu0 0.0
  %514 = vmatprep.subr.mxu0 0.0
  %515 = vmatpush1.msra.mxu0 0.0
  %516 = vmatprep.subr.mxu0 0.0
  %517 = vmatpush1.msra.mxu0 0.0
  %518 = vmatprep.subr.mxu0 0.0
  %519 = vmatpush1.msra.mxu0 0.0
  %520 = vmatprep.subr.mxu0 0.0
  %521 = vmatpush1.msra.mxu0 0.0
  %522 = vmatprep.subr.mxu0 0.0
  %523 = vmatpush1.msra.mxu0 %v187
  %524 = vmatprep.subr.mxu0 0.0
  %525 = vmatpush1.msra.mxu0 %v186
  %526 = vmatprep.subr.mxu0 0.0
  %527 = vmatpush1.msra.mxu0 %v185
  %528 = vmatprep.subr.mxu0 0.0
  %529 = vmatpush1.msra.mxu0 %v184
  %530 = vmatprep.subr.mxu0 0.0
  %531 = vmatpush2.msra.mxu0 0.0
  %532 = vmatprep.subr.mxu0 0.0
  %533 = vmatpush2.msra.mxu0 0.0
  %534 = vmatprep.subr.mxu0 0.0
  %535 = vmatpush2.msra.mxu0 0.0
  %536 = vmatprep.subr.mxu0 0.0
  %537 = vmatpush2.msra.mxu0 0.0
  %538 = vmatprep.subr.mxu0 0.0
  %539 = vmatpush2.msra.mxu0 0.0
  %540 = vmatprep.subr.mxu0 0.0
  %541 = vmatpush2.msra.mxu0 0.0
  %542 = vmatprep.subr.mxu0 0.0
  %543 = vmatpush2.msra.mxu0 0.0
  %544 = vmatprep.subr.mxu0 0.0
  %545 = vmatpush2.msra.mxu0 0.0
  %546 = vmatprep.subr.mxu0 0.0
  %547 = vmatpush2.msra.mxu0 0.0
  %548 = vmatprep.subr.mxu0 0.0
  %549 = vmatpush2.msra.mxu0 0.0
  %550 = vmatprep.subr.mxu0 0.0
  %551 = vmatpush2.msra.mxu0 0.0
  %552 = vmatprep.subr.mxu0 0.0
  %553 = vmatpush2.msra.mxu0 0.0
  %554 = vmatprep.subr.mxu0 0.0
  %555 = vmatpush2.msra.mxu0 0.0
  %556 = vmatprep.subr.mxu0 0.0
  %557 = vmatpush2.msra.mxu0 0.0
  %558 = vmatprep.subr.mxu0 0.0
  %559 = vmatpush2.msra.mxu0 0.0
  %560 = vmatprep.subr.mxu0 0.0
  %561 = vmatpush2.msra.mxu0 0.0
  %562 = vmatprep.mubr.f32.mxu0 0.0
  %563 = vmatmul.mubr.f32.gmra.mxu0 %v496
  %v564 = vpop.f32.mrf.mxu0
  %v565 = vadd.f32 0.0, %v564
  %v566 = vpop.f32.mrf.mxu0
  %567 = vdwg.mxu0
  %v568 = vadd.f32 %v161, %v565
  %v569 = vxor.u32 %v568, 2147483648
  %v570 = vmul.f32 %v569, 1.442695
  %v571 = vpow.pop %v570
  %v572 = vadd.f32 %v571, 1.0
  %v573 = vrcp.pop %v572
  %v574 = vmul.f32 1.0, %v573
  %v575 = vtanh.pop %v568
  %v576 = vmul.f32 %v574, %v484
  %578 = vrot.lane.b32.xlu0 %v575, 32
  %v579 = vpop.permute.xlu0 %578
  %v581 = vmul.f32 %v574, %v579
  %583 = vrot.lane.b32.xlu0 %v581, 32
  %v584 = vpop.permute.xlu0 %583
  %v586 = vadd.f32 %v576, %v584
  %v587 = vtanh.pop %v586
  %589 = vrot.lane.b32.xlu0 %v587, 32
  %v590 = vpop.permute.xlu0 %589
  %v592 = vmul.f32 %v574, %v590
  %594 = vrot.lane.b32.xlu0 %v592, 64
  %v595 = vpop.permute.xlu0 %594
  %597 = vst.msk [vmem:[#allocation2 + $0x18] sm:$0xff] %vm188, %v595
  %v598 = vsel %vm188, %v595, 0
  %600 = vmatprep.subr.mxu0 0.0
  %601 = vmatpush1.msra.mxu0 0.0
  %602 = vmatprep.subr.mxu0 0.0
  %603 = vmatpush1.msra.mxu0 0.0
  %604 = vmatprep.subr.mxu0 0.0
  %605 = vmatpush1.msra.mxu0 0.0
  %606 = vmatprep.subr.mxu0 0.0
  %607 = vmatpush1.msra.mxu0 0.0
  %608 = vmatprep.subr.mxu0 0.0
  %609 = vmatpush1.msra.mxu0 0.0
  %610 = vmatprep.subr.mxu0 0.0
  %611 = vmatpush1.msra.mxu0 0.0
  %612 = vmatprep.subr.mxu0 0.0
  %613 = vmatpush1.msra.mxu0 0.0
  %614 = vmatprep.subr.mxu0 0.0
  %615 = vmatpush1.msra.mxu0 0.0
  %616 = vmatprep.subr.mxu0 0.0
  %617 = vmatpush1.msra.mxu0 0.0
  %618 = vmatprep.subr.mxu0 0.0
  %619 = vmatpush1.msra.mxu0 0.0
  %620 = vmatprep.subr.mxu0 0.0
  %621 = vmatpush1.msra.mxu0 0.0
  %622 = vmatprep.subr.mxu0 0.0
  %623 = vmatpush1.msra.mxu0 0.0
  %624 = vmatprep.subr.mxu0 0.0
  %625 = vmatpush1.msra.mxu0 %v187
  %626 = vmatprep.subr.mxu0 0.0
  %627 = vmatpush1.msra.mxu0 %v186
  %628 = vmatprep.subr.mxu0 0.0
  %629 = vmatpush1.msra.mxu0 %v185
  %630 = vmatprep.subr.mxu0 0.0
  %631 = vmatpush1.msra.mxu0 %v184
  %632 = vmatprep.subr.mxu0 0.0
  %633 = vmatpush2.msra.mxu0 0.0
  %634 = vmatprep.subr.mxu0 0.0
  %635 = vmatpush2.msra.mxu0 0.0
  %636 = vmatprep.subr.mxu0 0.0
  %637 = vmatpush2.msra.mxu0 0.0
  %638 = vmatprep.subr.mxu0 0.0
  %639 = vmatpush2.msra.mxu0 0.0
  %640 = vmatprep.subr.mxu0 0.0
  %641 = vmatpush2.msra.mxu0 0.0
  %642 = vmatprep.subr.mxu0 0.0
  %643 = vmatpush2.msra.mxu0 0.0
  %644 = vmatprep.subr.mxu0 0.0
  %645 = vmatpush2.msra.mxu0 0.0
  %646 = vmatprep.subr.mxu0 0.0
  %647 = vmatpush2.msra.mxu0 0.0
  %648 = vmatprep.subr.mxu0 0.0
  %649 = vmatpush2.msra.mxu0 0.0
  %650 = vmatprep.subr.mxu0 0.0
  %651 = vmatpush2.msra.mxu0 0.0
  %652 = vmatprep.subr.mxu0 0.0
  %653 = vmatpush2.msra.mxu0 0.0
  %654 = vmatprep.subr.mxu0 0.0
  %655 = vmatpush2.msra.mxu0 0.0
  %656 = vmatprep.subr.mxu0 0.0
  %657 = vmatpush2.msra.mxu0 0.0
  %658 = vmatprep.subr.mxu0 0.0
  %659 = vmatpush2.msra.mxu0 0.0
  %660 = vmatprep.subr.mxu0 0.0
  %661 = vmatpush2.msra.mxu0 0.0
  %662 = vmatprep.subr.mxu0 0.0
  %663 = vmatpush2.msra.mxu0 0.0
  %664 = vmatprep.mubr.f32.mxu0 0.0
  %665 = vmatmul.mubr.f32.gmra.mxu0 %v598
  %v666 = vpop.f32.mrf.mxu0
  %v667 = vadd.f32 0.0, %v666
  %v668 = vpop.f32.mrf.mxu0
  %669 = vdwg.mxu0
  %v670 = vadd.f32 %v166, %v667
  %v671 = vxor.u32 %v670, 2147483648
  %v672 = vmul.f32 %v671, 1.442695
  %v673 = vpow.pop %v672
  %v674 = vadd.f32 %v673, 1.0
  %v675 = vrcp.pop %v674
  %v676 = vmul.f32 1.0, %v675
  %v677 = vtanh.pop %v670
  %v678 = vmul.f32 %v676, %v586
  %680 = vrot.lane.b32.xlu0 %v677, 32
  %v681 = vpop.permute.xlu0 %680
  %v683 = vmul.f32 %v676, %v681
  %685 = vrot.lane.b32.xlu0 %v683, 32
  %v686 = vpop.permute.xlu0 %685
  %v688 = vadd.f32 %v678, %v686
  %v689 = vtanh.pop %v688
  %691 = vrot.lane.b32.xlu0 %v689, 32
  %v692 = vpop.permute.xlu0 %691
  %v694 = vmul.f32 %v676, %v692
  %696 = vrot.lane.b32.xlu0 %v694, 64
  %v697 = vpop.permute.xlu0 %696
  %699 = vst.msk [vmem:[#allocation2 + $0x20] sm:$0xff] %vm188, %v697
  %v700 = vsel %vm188, %v697, 0
  %702 = vmatprep.subr.mxu0 0.0
  %703 = vmatpush1.msra.mxu0 0.0
  %704 = vmatprep.subr.mxu0 0.0
  %705 = vmatpush1.msra.mxu0 0.0
  %706 = vmatprep.subr.mxu0 0.0
  %707 = vmatpush1.msra.mxu0 0.0
  %708 = vmatprep.subr.mxu0 0.0
  %709 = vmatpush1.msra.mxu0 0.0
  %710 = vmatprep.subr.mxu0 0.0
  %711 = vmatpush1.msra.mxu0 0.0
  %712 = vmatprep.subr.mxu0 0.0
  %713 = vmatpush1.msra.mxu0 0.0
  %714 = vmatprep.subr.mxu0 0.0
  %715 = vmatpush1.msra.mxu0 0.0
  %716 = vmatprep.subr.mxu0 0.0
  %717 = vmatpush1.msra.mxu0 0.0
  %718 = vmatprep.subr.mxu0 0.0
  %719 = vmatpush1.msra.mxu0 0.0
  %720 = vmatprep.subr.mxu0 0.0
  %721 = vmatpush1.msra.mxu0 0.0
  %722 = vmatprep.subr.mxu0 0.0
  %723 = vmatpush1.msra.mxu0 0.0
  %724 = vmatprep.subr.mxu0 0.0
  %725 = vmatpush1.msra.mxu0 0.0
  %726 = vmatprep.subr.mxu0 0.0
  %727 = vmatpush1.msra.mxu0 %v187
  %728 = vmatprep.subr.mxu0 0.0
  %729 = vmatpush1.msra.mxu0 %v186
  %730 = vmatprep.subr.mxu0 0.0
  %731 = vmatpush1.msra.mxu0 %v185
  %732 = vmatprep.subr.mxu0 0.0
  %733 = vmatpush1.msra.mxu0 %v184
  %734 = vmatprep.subr.mxu0 0.0
  %735 = vmatpush2.msra.mxu0 0.0
  %736 = vmatprep.subr.mxu0 0.0
  %737 = vmatpush2.msra.mxu0 0.0
  %738 = vmatprep.subr.mxu0 0.0
  %739 = vmatpush2.msra.mxu0 0.0
  %740 = vmatprep.subr.mxu0 0.0
  %741 = vmatpush2.msra.mxu0 0.0
  %742 = vmatprep.subr.mxu0 0.0
  %743 = vmatpush2.msra.mxu0 0.0
  %744 = vmatprep.subr.mxu0 0.0
  %745 = vmatpush2.msra.mxu0 0.0
  %746 = vmatprep.subr.mxu0 0.0
  %747 = vmatpush2.msra.mxu0 0.0
  %748 = vmatprep.subr.mxu0 0.0
  %749 = vmatpush2.msra.mxu0 0.0
  %750 = vmatprep.subr.mxu0 0.0
  %751 = vmatpush2.msra.mxu0 0.0
  %752 = vmatprep.subr.mxu0 0.0
  %753 = vmatpush2.msra.mxu0 0.0
  %754 = vmatprep.subr.mxu0 0.0
  %755 = vmatpush2.msra.mxu0 0.0
  %756 = vmatprep.subr.mxu0 0.0
  %757 = vmatpush2.msra.mxu0 0.0
  %758 = vmatprep.subr.mxu0 0.0
  %759 = vmatpush2.msra.mxu0 0.0
  %760 = vmatprep.subr.mxu0 0.0
  %761 = vmatpush2.msra.mxu0 0.0
  %762 = vmatprep.subr.mxu0 0.0
  %763 = vmatpush2.msra.mxu0 0.0
  %764 = vmatprep.subr.mxu0 0.0
  %765 = vmatpush2.msra.mxu0 0.0
  %766 = vmatprep.mubr.f32.mxu0 0.0
  %767 = vmatmul.mubr.f32.gmra.mxu0 %v700
  %v768 = vpop.f32.mrf.mxu0
  %v769 = vadd.f32 0.0, %v768
  %v770 = vpop.f32.mrf.mxu0
  %771 = vdwg.mxu0
  %v772 = vadd.f32 %v171, %v769
  %v773 = vxor.u32 %v772, 2147483648
  %v774 = vmul.f32 %v773, 1.442695
  %v775 = vpow.pop %v774
  %v776 = vadd.f32 %v775, 1.0
  %v777 = vrcp.pop %v776
  %v778 = vmul.f32 1.0, %v777
  %v779 = vtanh.pop %v772
  %v780 = vmul.f32 %v778, %v688
  %782 = vrot.lane.b32.xlu0 %v779, 32
  %v783 = vpop.permute.xlu0 %782
  %v785 = vmul.f32 %v778, %v783
  %787 = vrot.lane.b32.xlu0 %v785, 32
  %v788 = vpop.permute.xlu0 %787
  %v790 = vadd.f32 %v780, %v788
  %v791 = vtanh.pop %v790
  %793 = vrot.lane.b32.xlu0 %v791, 32
  %v794 = vpop.permute.xlu0 %793
  %v796 = vmul.f32 %v778, %v794
  %798 = vrot.lane.b32.xlu0 %v796, 64
  %v799 = vpop.permute.xlu0 %798
  %801 = vst.msk [vmem:[#allocation2 + $0x28] sm:$0xff] %vm188, %v799
  %v802 = vsel %vm188, %v799, 0
  %804 = vmatprep.subr.mxu0 0.0
  %805 = vmatpush1.msra.mxu0 0.0
  %806 = vmatprep.subr.mxu0 0.0
  %807 = vmatpush1.msra.mxu0 0.0
  %808 = vmatprep.subr.mxu0 0.0
  %809 = vmatpush1.msra.mxu0 0.0
  %810 = vmatprep.subr.mxu0 0.0
  %811 = vmatpush1.msra.mxu0 0.0
  %812 = vmatprep.subr.mxu0 0.0
  %813 = vmatpush1.msra.mxu0 0.0
  %814 = vmatprep.subr.mxu0 0.0
  %815 = vmatpush1.msra.mxu0 0.0
  %816 = vmatprep.subr.mxu0 0.0
  %817 = vmatpush1.msra.mxu0 0.0
  %818 = vmatprep.subr.mxu0 0.0
  %819 = vmatpush1.msra.mxu0 0.0
  %820 = vmatprep.subr.mxu0 0.0
  %821 = vmatpush1.msra.mxu0 0.0
  %822 = vmatprep.subr.mxu0 0.0
  %823 = vmatpush1.msra.mxu0 0.0
  %824 = vmatprep.subr.mxu0 0.0
  %825 = vmatpush1.msra.mxu0 0.0
  %826 = vmatprep.subr.mxu0 0.0
  %827 = vmatpush1.msra.mxu0 0.0
  %828 = vmatprep.subr.mxu0 0.0
  %829 = vmatpush1.msra.mxu0 %v187
  %830 = vmatprep.subr.mxu0 0.0
  %831 = vmatpush1.msra.mxu0 %v186
  %832 = vmatprep.subr.mxu0 0.0
  %833 = vmatpush1.msra.mxu0 %v185
  %834 = vmatprep.subr.mxu0 0.0
  %835 = vmatpush1.msra.mxu0 %v184
  %836 = vmatprep.subr.mxu0 0.0
  %837 = vmatpush2.msra.mxu0 0.0
  %838 = vmatprep.subr.mxu0 0.0
  %839 = vmatpush2.msra.mxu0 0.0
  %840 = vmatprep.subr.mxu0 0.0
  %841 = vmatpush2.msra.mxu0 0.0
  %842 = vmatprep.subr.mxu0 0.0
  %843 = vmatpush2.msra.mxu0 0.0
  %844 = vmatprep.subr.mxu0 0.0
  %845 = vmatpush2.msra.mxu0 0.0
  %846 = vmatprep.subr.mxu0 0.0
  %847 = vmatpush2.msra.mxu0 0.0
  %848 = vmatprep.subr.mxu0 0.0
  %849 = vmatpush2.msra.mxu0 0.0
  %850 = vmatprep.subr.mxu0 0.0
  %851 = vmatpush2.msra.mxu0 0.0
  %852 = vmatprep.subr.mxu0 0.0
  %853 = vmatpush2.msra.mxu0 0.0
  %854 = vmatprep.subr.mxu0 0.0
  %855 = vmatpush2.msra.mxu0 0.0
  %856 = vmatprep.subr.mxu0 0.0
  %857 = vmatpush2.msra.mxu0 0.0
  %858 = vmatprep.subr.mxu0 0.0
  %859 = vmatpush2.msra.mxu0 0.0
  %860 = vmatprep.subr.mxu0 0.0
  %861 = vmatpush2.msra.mxu0 0.0
  %862 = vmatprep.subr.mxu0 0.0
  %863 = vmatpush2.msra.mxu0 0.0
  %864 = vmatprep.subr.mxu0 0.0
  %865 = vmatpush2.msra.mxu0 0.0
  %866 = vmatprep.subr.mxu0 0.0
  %867 = vmatpush2.msra.mxu0 0.0
  %868 = vmatprep.mubr.f32.mxu0 0.0
  %869 = vmatmul.mubr.f32.gmra.mxu0 %v802
  %v870 = vpop.f32.mrf.mxu0
  %v871 = vadd.f32 0.0, %v870
  %v872 = vpop.f32.mrf.mxu0
  %873 = vdwg.mxu0
  %v874 = vadd.f32 %v176, %v871
  %v875 = vxor.u32 %v874, 2147483648
  %v876 = vmul.f32 %v875, 1.442695
  %v877 = vpow.pop %v876
  %v878 = vadd.f32 %v877, 1.0
  %v879 = vrcp.pop %v878
  %v880 = vmul.f32 1.0, %v879
  %v881 = vtanh.pop %v874
  %v882 = vmul.f32 %v880, %v790
  %884 = vrot.lane.b32.xlu0 %v881, 32
  %v885 = vpop.permute.xlu0 %884
  %v887 = vmul.f32 %v880, %v885
  %889 = vrot.lane.b32.xlu0 %v887, 32
  %v890 = vpop.permute.xlu0 %889
  %v892 = vadd.f32 %v882, %v890
  %v893 = vtanh.pop %v892
  %895 = vrot.lane.b32.xlu0 %v893, 32
  %v896 = vpop.permute.xlu0 %895
  %v898 = vmul.f32 %v880, %v896
  %900 = vrot.lane.b32.xlu0 %v898, 64
  %v901 = vpop.permute.xlu0 %900
  %903 = vst.msk [vmem:[#allocation2 + $0x30] sm:$0xff] %vm188, %v901
  %v904 = vsel %vm188, %v901, 0
  %906 = vmatprep.subr.mxu0 0.0
  %907 = vmatpush1.msra.mxu0 0.0
  %908 = vmatprep.subr.mxu0 0.0
  %909 = vmatpush1.msra.mxu0 0.0
  %910 = vmatprep.subr.mxu0 0.0
  %911 = vmatpush1.msra.mxu0 0.0
  %912 = vmatprep.subr.mxu0 0.0
  %913 = vmatpush1.msra.mxu0 0.0
  %914 = vmatprep.subr.mxu0 0.0
  %915 = vmatpush1.msra.mxu0 0.0
  %916 = vmatprep.subr.mxu0 0.0
  %917 = vmatpush1.msra.mxu0 0.0
  %918 = vmatprep.subr.mxu0 0.0
  %919 = vmatpush1.msra.mxu0 0.0
  %920 = vmatprep.subr.mxu0 0.0
  %921 = vmatpush1.msra.mxu0 0.0
  %922 = vmatprep.subr.mxu0 0.0
  %923 = vmatpush1.msra.mxu0 0.0
  %924 = vmatprep.subr.mxu0 0.0
  %925 = vmatpush1.msra.mxu0 0.0
  %926 = vmatprep.subr.mxu0 0.0
  %927 = vmatpush1.msra.mxu0 0.0
  %928 = vmatprep.subr.mxu0 0.0
  %929 = vmatpush1.msra.mxu0 0.0
  %930 = vmatprep.subr.mxu0 0.0
  %931 = vmatpush1.msra.mxu0 %v187
  %932 = vmatprep.subr.mxu0 0.0
  %933 = vmatpush1.msra.mxu0 %v186
  %934 = vmatprep.subr.mxu0 0.0
  %935 = vmatpush1.msra.mxu0 %v185
  %936 = vmatprep.subr.mxu0 0.0
  %937 = vmatpush1.msra.mxu0 %v184
  %938 = vmatprep.subr.mxu0 0.0
  %939 = vmatpush2.msra.mxu0 0.0
  %940 = vmatprep.subr.mxu0 0.0
  %941 = vmatpush2.msra.mxu0 0.0
  %942 = vmatprep.subr.mxu0 0.0
  %943 = vmatpush2.msra.mxu0 0.0
  %944 = vmatprep.subr.mxu0 0.0
  %945 = vmatpush2.msra.mxu0 0.0
  %946 = vmatprep.subr.mxu0 0.0
  %947 = vmatpush2.msra.mxu0 0.0
  %948 = vmatprep.subr.mxu0 0.0
  %949 = vmatpush2.msra.mxu0 0.0
  %950 = vmatprep.subr.mxu0 0.0
  %951 = vmatpush2.msra.mxu0 0.0
  %952 = vmatprep.subr.mxu0 0.0
  %953 = vmatpush2.msra.mxu0 0.0
  %954 = vmatprep.subr.mxu0 0.0
  %955 = vmatpush2.msra.mxu0 0.0
  %956 = vmatprep.subr.mxu0 0.0
  %957 = vmatpush2.msra.mxu0 0.0
  %958 = vmatprep.subr.mxu0 0.0
  %959 = vmatpush2.msra.mxu0 0.0
  %960 = vmatprep.subr.mxu0 0.0
  %961 = vmatpush2.msra.mxu0 0.0
  %962 = vmatprep.subr.mxu0 0.0
  %963 = vmatpush2.msra.mxu0 0.0
  %964 = vmatprep.subr.mxu0 0.0
  %965 = vmatpush2.msra.mxu0 0.0
  %966 = vmatprep.subr.mxu0 0.0
  %967 = vmatpush2.msra.mxu0 0.0
  %968 = vmatprep.subr.mxu0 0.0
  %969 = vmatpush2.msra.mxu0 0.0
  %970 = vmatprep.mubr.f32.mxu0 0.0
  %971 = vmatmul.mubr.f32.gmra.mxu0 %v904
  %v972 = vpop.f32.mrf.mxu0
  %v973 = vadd.f32 0.0, %v972
  %v974 = vpop.f32.mrf.mxu0
  %975 = vdwg.mxu0
  %v976 = vadd.f32 %v181, %v973
  %v977 = vxor.u32 %v976, 2147483648
  %v978 = vmul.f32 %v977, 1.442695
  %v979 = vpow.pop %v978
  %v980 = vadd.f32 %v979, 1.0
  %v981 = vrcp.pop %v980
  %v982 = vmul.f32 1.0, %v981
  %v983 = vtanh.pop %v976
  %v984 = vmul.f32 %v982, %v892
  %986 = vrot.lane.b32.xlu0 %v983, 32
  %v987 = vpop.permute.xlu0 %986
  %v989 = vmul.f32 %v982, %v987
  %991 = vrot.lane.b32.xlu0 %v989, 32
  %v992 = vpop.permute.xlu0 %991
  %v994 = vadd.f32 %v984, %v992
  %v995 = vtanh.pop %v994
  %997 = vrot.lane.b32.xlu0 %v995, 32
  %v998 = vpop.permute.xlu0 %997
  %v1000 = vmul.f32 %v982, %v998
  %1002 = vrot.lane.b32.xlu0 %v1000, 64
  %v1003 = vpop.permute.xlu0 %1002
  %1005 = vst.msk [vmem:[#allocation2 + $0x38] sm:$0xff] %vm188, %v1003
  %v1006 = vld [vmem:[#allocation2] sm:$0xff]
  %v1007 = vld [vmem:[#allocation2 + $0x8] sm:$0xff]
  %v1008 = vld [vmem:[#allocation2 + $0x10] sm:$0xff]
  %v1009 = vld [vmem:[#allocation2 + $0x18] sm:$0xff]
  %v1010 = vld [vmem:[#allocation2 + $0x20] sm:$0xff]
  %v1011 = vld [vmem:[#allocation2 + $0x28] sm:$0xff]
  %v1012 = vld [vmem:[#allocation2 + $0x30] sm:$0xff]
  %v1013 = vld [vmem:[#allocation2 + $0x38] sm:$0xff]
  %v1014 = vld [vmem:[%s4] sm:$0xff]
  %v1015 = vld [vmem:[%s4 + $0x8] sm:$0xff]
  %v1016 = vld [vmem:[%s4 + $0x10] sm:$0xff]
  %v1017 = vld [vmem:[%s4 + $0x18] sm:$0xff]
  %v1018 = vld [vmem:[%s6] sm:$0x1]
  %v1020 = vlaneseq
  %v1021 = vshrl.u32 %v1020, 7
  %v1022 = vsub.s32 0, %v1021
  %v1023 = vrot.slane %v1018, %v1022
  %v1026 = vsel %vm188, %v1006, 0
  %v1029 = vsel %vm188, %v1007, 0
  %v1032 = vsel %vm188, %v1008, 0
  %v1035 = vsel %vm188, %v1009, 0
  %v1038 = vsel %vm188, %v1010, 0
  %v1041 = vsel %vm188, %v1011, 0
  %v1044 = vsel %vm188, %v1012, 0
  %v1047 = vsel %vm188, %v1013, 0
  %1049 = vmatprep.subr.mxu0 0.0
  %1050 = vmatpush1.msra.mxu0 0.0
  %1051 = vmatprep.subr.mxu0 0.0
  %1052 = vmatpush1.msra.mxu0 0.0
  %1053 = vmatprep.subr.mxu0 0.0
  %1054 = vmatpush1.msra.mxu0 0.0
  %1055 = vmatprep.subr.mxu0 0.0
  %1056 = vmatpush1.msra.mxu0 0.0
  %1057 = vmatprep.subr.mxu0 0.0
  %1058 = vmatpush1.msra.mxu0 0.0
  %1059 = vmatprep.subr.mxu0 0.0
  %1060 = vmatpush1.msra.mxu0 0.0
  %1061 = vmatprep.subr.mxu0 0.0
  %1062 = vmatpush1.msra.mxu0 0.0
  %1063 = vmatprep.subr.mxu0 0.0
  %1064 = vmatpush1.msra.mxu0 0.0
  %1065 = vmatprep.subr.mxu0 0.0
  %1066 = vmatpush1.msra.mxu0 0.0
  %1067 = vmatprep.subr.mxu0 0.0
  %1068 = vmatpush1.msra.mxu0 0.0
  %1069 = vmatprep.subr.mxu0 0.0
  %1070 = vmatpush1.msra.mxu0 0.0
  %1071 = vmatprep.subr.mxu0 0.0
  %1072 = vmatpush1.msra.mxu0 0.0
  %1073 = vmatprep.subr.mxu0 0.0
  %1074 = vmatpush1.msra.mxu0 %v1017
  %1075 = vmatprep.subr.mxu0 0.0
  %1076 = vmatpush1.msra.mxu0 %v1016
  %1077 = vmatprep.subr.mxu0 0.0
  %1078 = vmatpush1.msra.mxu0 %v1015
  %1079 = vmatprep.subr.mxu0 0.0
  %1080 = vmatpush1.msra.mxu0 %v1014
  %1081 = vmatprep.subr.mxu0 0.0
  %1082 = vmatpush2.msra.mxu0 0.0
  %1083 = vmatprep.subr.mxu0 0.0
  %1084 = vmatpush2.msra.mxu0 0.0
  %1085 = vmatprep.subr.mxu0 0.0
  %1086 = vmatpush2.msra.mxu0 0.0
  %1087 = vmatprep.subr.mxu0 0.0
  %1088 = vmatpush2.msra.mxu0 0.0
  %1089 = vmatprep.subr.mxu0 0.0
  %1090 = vmatpush2.msra.mxu0 0.0
  %1091 = vmatprep.subr.mxu0 0.0
  %1092 = vmatpush2.msra.mxu0 0.0
  %1093 = vmatprep.subr.mxu0 0.0
  %1094 = vmatpush2.msra.mxu0 0.0
  %1095 = vmatprep.subr.mxu0 0.0
  %1096 = vmatpush2.msra.mxu0 0.0
  %1097 = vmatprep.subr.mxu0 0.0
  %1098 = vmatpush2.msra.mxu0 0.0
  %1099 = vmatprep.subr.mxu0 0.0
  %1100 = vmatpush2.msra.mxu0 0.0
  %1101 = vmatprep.subr.mxu0 0.0
  %1102 = vmatpush2.msra.mxu0 0.0
  %1103 = vmatprep.subr.mxu0 0.0
  %1104 = vmatpush2.msra.mxu0 0.0
  %1105 = vmatprep.subr.mxu0 0.0
  %1106 = vmatpush2.msra.mxu0 0.0
  %1107 = vmatprep.subr.mxu0 0.0
  %1108 = vmatpush2.msra.mxu0 0.0
  %1109 = vmatprep.subr.mxu0 0.0
  %1110 = vmatpush2.msra.mxu0 0.0
  %1111 = vmatprep.subr.mxu0 0.0
  %1112 = vmatpush2.msra.mxu0 0.0
  %1113 = vmatprep.mubr.f32.mxu0 0.0
  %1114 = vmatmul.mubr.f32.gmra.mxu0 %v1026
  %v1115 = vpop.f32.mrf.mxu0
  %v1116 = vadd.f32 %v1023, %v1115
  %v1117 = vpop.f32.mrf.mxu0
  %1118 = vmatprep.mubr.f32.mxu0 0.0
  %1119 = vmatmul.mubr.f32.gmra.mxu0 %v1029
  %v1120 = vpop.f32.mrf.mxu0
  %v1121 = vadd.f32 %v1023, %v1120
  %v1122 = vpop.f32.mrf.mxu0
  %1123 = vmatprep.mubr.f32.mxu0 0.0
  %1124 = vmatmul.mubr.f32.gmra.mxu0 %v1032
  %v1125 = vpop.f32.mrf.mxu0
  %v1126 = vadd.f32 %v1023, %v1125
  %v1127 = vpop.f32.mrf.mxu0
  %1128 = vmatprep.mubr.f32.mxu0 0.0
  %1129 = vmatmul.mubr.f32.gmra.mxu0 %v1035
  %v1130 = vpop.f32.mrf.mxu0
  %v1131 = vadd.f32 %v1023, %v1130
  %v1132 = vpop.f32.mrf.mxu0
  %1133 = vmatprep.mubr.f32.mxu0 0.0
  %1134 = vmatmul.mubr.f32.gmra.mxu0 %v1038
  %v1135 = vpop.f32.mrf.mxu0
  %v1136 = vadd.f32 %v1023, %v1135
  %v1137 = vpop.f32.mrf.mxu0
  %1138 = vmatprep.mubr.f32.mxu0 0.0
  %1139 = vmatmul.mubr.f32.gmra.mxu0 %v1041
  %v1140 = vpop.f32.mrf.mxu0
  %v1141 = vadd.f32 %v1023, %v1140
  %v1142 = vpop.f32.mrf.mxu0
  %1143 = vmatprep.mubr.f32.mxu0 0.0
  %1144 = vmatmul.mubr.f32.gmra.mxu0 %v1044
  %v1145 = vpop.f32.mrf.mxu0
  %v1146 = vadd.f32 %v1023, %v1145
  %v1147 = vpop.f32.mrf.mxu0
  %1148 = vmatprep.mubr.f32.mxu0 0.0
  %1149 = vmatmul.mubr.f32.gmra.mxu0 %v1047
  %v1150 = vpop.f32.mrf.mxu0
  %v1151 = vadd.f32 %v1023, %v1150
  %v1152 = vpop.f32.mrf.mxu0
  %1153 = vdwg.mxu0
  %v1154 = vld [vmem:[%s5] sm:$0xff]
  %v1155 = vld [vmem:[%s5 + $0x8] sm:$0xff]
  %v1156 = vld [vmem:[%s5 + $0x10] sm:$0xff]
  %v1157 = vld [vmem:[%s5 + $0x18] sm:$0xff]
  %1158 = vmatprep.subr.mxu0 0.0
  %1159 = vmatpush1.msra.mxu0 0.0
  %1160 = vmatprep.subr.mxu0 0.0
  %1161 = vmatpush1.msra.mxu0 0.0
  %1162 = vmatprep.subr.mxu0 0.0
  %1163 = vmatpush1.msra.mxu0 0.0
  %1164 = vmatprep.subr.mxu0 0.0
  %1165 = vmatpush1.msra.mxu0 0.0
  %1166 = vmatprep.subr.mxu0 0.0
  %1167 = vmatpush1.msra.mxu0 0.0
  %1168 = vmatprep.subr.mxu0 0.0
  %1169 = vmatpush1.msra.mxu0 0.0
  %1170 = vmatprep.subr.mxu0 0.0
  %1171 = vmatpush1.msra.mxu0 0.0
  %1172 = vmatprep.subr.mxu0 0.0
  %1173 = vmatpush1.msra.mxu0 0.0
  %1174 = vmatprep.subr.mxu0 0.0
  %1175 = vmatpush1.msra.mxu0 0.0
  %1176 = vmatprep.subr.mxu0 0.0
  %1177 = vmatpush1.msra.mxu0 0.0
  %1178 = vmatprep.subr.mxu0 0.0
  %1179 = vmatpush1.msra.mxu0 0.0
  %1180 = vmatprep.subr.mxu0 0.0
  %1181 = vmatpush1.msra.mxu0 0.0
  %1182 = vmatprep.subr.mxu0 0.0
  %1183 = vmatpush1.msra.mxu0 %v1157
  %1184 = vmatprep.subr.mxu0 0.0
  %1185 = vmatpush1.msra.mxu0 %v1156
  %1186 = vmatprep.subr.mxu0 0.0
  %1187 = vmatpush1.msra.mxu0 %v1155
  %1188 = vmatprep.subr.mxu0 0.0
  %1189 = vmatpush1.msra.mxu0 %v1154
  %1190 = vmatprep.subr.mxu0 0.0
  %1191 = vmatpush2.msra.mxu0 0.0
  %1192 = vmatprep.subr.mxu0 0.0
  %1193 = vmatpush2.msra.mxu0 0.0
  %1194 = vmatprep.subr.mxu0 0.0
  %1195 = vmatpush2.msra.mxu0 0.0
  %1196 = vmatprep.subr.mxu0 0.0
  %1197 = vmatpush2.msra.mxu0 0.0
  %1198 = vmatprep.subr.mxu0 0.0
  %1199 = vmatpush2.msra.mxu0 0.0
  %1200 = vmatprep.subr.mxu0 0.0
  %1201 = vmatpush2.msra.mxu0 0.0
  %1202 = vmatprep.subr.mxu0 0.0
  %1203 = vmatpush2.msra.mxu0 0.0
  %1204 = vmatprep.subr.mxu0 0.0
  %1205 = vmatpush2.msra.mxu0 0.0
  %1206 = vmatprep.subr.mxu0 0.0
  %1207 = vmatpush2.msra.mxu0 0.0
  %1208 = vmatprep.subr.mxu0 0.0
  %1209 = vmatpush2.msra.mxu0 0.0
  %1210 = vmatprep.subr.mxu0 0.0
  %1211 = vmatpush2.msra.mxu0 0.0
  %1212 = vmatprep.subr.mxu0 0.0
  %1213 = vmatpush2.msra.mxu0 0.0
  %1214 = vmatprep.subr.mxu0 0.0
  %1215 = vmatpush2.msra.mxu0 0.0
  %1216 = vmatprep.subr.mxu0 0.0
  %1217 = vmatpush2.msra.mxu0 0.0
  %1218 = vmatprep.subr.mxu0 0.0
  %1219 = vmatpush2.msra.mxu0 0.0
  %1220 = vmatprep.subr.mxu0 0.0
  %1221 = vmatpush2.msra.mxu0 0.0
  %1222 = vmatprep.mubr.f32.mxu0 0.0
  %1223 = vmatmul.mubr.f32.gmra.mxu0 %v190
  %v1224 = vpop.f32.mrf.mxu0
  %v1225 = vadd.f32 0.0, %v1224
  %v1226 = vpop.f32.mrf.mxu0
  %1227 = vdwg.mxu0
  %v1228 = vadd.f32 %v1116, %v1225
  %v1229 = vxor.u32 %v1228, 2147483648
  %v1230 = vmul.f32 %v1229, 1.442695
  %v1231 = vpow.pop %v1230
  %v1232 = vadd.f32 %v1231, 1.0
  %v1233 = vrcp.pop %v1232
  %v1234 = vmul.f32 1.0, %v1233
  %v1235 = vtanh.pop %v1228
  %v1236 = vmul.f32 %v1234, 0.0
  %1238 = vrot.lane.b32.xlu0 %v1235, 32
  %v1239 = vpop.permute.xlu0 %1238
  %v1241 = vmul.f32 %v1234, %v1239
  %1243 = vrot.lane.b32.xlu0 %v1241, 32
  %v1244 = vpop.permute.xlu0 %1243
  %v1246 = vadd.f32 %v1236, %v1244
  %v1247 = vtanh.pop %v1246
  %1249 = vrot.lane.b32.xlu0 %v1247, 32
  %v1250 = vpop.permute.xlu0 %1249
  %v1252 = vmul.f32 %v1234, %v1250
  %1254 = vrot.lane.b32.xlu0 %v1252, 64
  %v1255 = vpop.permute.xlu0 %1254
  %1257 = vst.msk [vmem:[#allocation2] sm:$0xff] %vm188, %v1255
  %v1258 = vsel %vm188, %v1255, 0
  %1260 = vmatprep.subr.mxu0 0.0
  %1261 = vmatpush1.msra.mxu0 0.0
  %1262 = vmatprep.subr.mxu0 0.0
  %1263 = vmatpush1.msra.mxu0 0.0
  %1264 = vmatprep.subr.mxu0 0.0
  %1265 = vmatpush1.msra.mxu0 0.0
  %1266 = vmatprep.subr.mxu0 0.0
  %1267 = vmatpush1.msra.mxu0 0.0
  %1268 = vmatprep.subr.mxu0 0.0
  %1269 = vmatpush1.msra.mxu0 0.0
  %1270 = vmatprep.subr.mxu0 0.0
  %1271 = vmatpush1.msra.mxu0 0.0
  %1272 = vmatprep.subr.mxu0 0.0
  %1273 = vmatpush1.msra.mxu0 0.0
  %1274 = vmatprep.subr.mxu0 0.0
  %1275 = vmatpush1.msra.mxu0 0.0
  %1276 = vmatprep.subr.mxu0 0.0
  %1277 = vmatpush1.msra.mxu0 0.0
  %1278 = vmatprep.subr.mxu0 0.0
  %1279 = vmatpush1.msra.mxu0 0.0
  %1280 = vmatprep.subr.mxu0 0.0
  %1281 = vmatpush1.msra.mxu0 0.0
  %1282 = vmatprep.subr.mxu0 0.0
  %1283 = vmatpush1.msra.mxu0 0.0
  %1284 = vmatprep.subr.mxu0 0.0
  %1285 = vmatpush1.msra.mxu0 %v1157
  %1286 = vmatprep.subr.mxu0 0.0
  %1287 = vmatpush1.msra.mxu0 %v1156
  %1288 = vmatprep.subr.mxu0 0.0
  %1289 = vmatpush1.msra.mxu0 %v1155
  %1290 = vmatprep.subr.mxu0 0.0
  %1291 = vmatpush1.msra.mxu0 %v1154
  %1292 = vmatprep.subr.mxu0 0.0
  %1293 = vmatpush2.msra.mxu0 0.0
  %1294 = vmatprep.subr.mxu0 0.0
  %1295 = vmatpush2.msra.mxu0 0.0
  %1296 = vmatprep.subr.mxu0 0.0
  %1297 = vmatpush2.msra.mxu0 0.0
  %1298 = vmatprep.subr.mxu0 0.0
  %1299 = vmatpush2.msra.mxu0 0.0
  %1300 = vmatprep.subr.mxu0 0.0
  %1301 = vmatpush2.msra.mxu0 0.0
  %1302 = vmatprep.subr.mxu0 0.0
  %1303 = vmatpush2.msra.mxu0 0.0
  %1304 = vmatprep.subr.mxu0 0.0
  %1305 = vmatpush2.msra.mxu0 0.0
  %1306 = vmatprep.subr.mxu0 0.0
  %1307 = vmatpush2.msra.mxu0 0.0
  %1308 = vmatprep.subr.mxu0 0.0
  %1309 = vmatpush2.msra.mxu0 0.0
  %1310 = vmatprep.subr.mxu0 0.0
  %1311 = vmatpush2.msra.mxu0 0.0
  %1312 = vmatprep.subr.mxu0 0.0
  %1313 = vmatpush2.msra.mxu0 0.0
  %1314 = vmatprep.subr.mxu0 0.0
  %1315 = vmatpush2.msra.mxu0 0.0
  %1316 = vmatprep.subr.mxu0 0.0
  %1317 = vmatpush2.msra.mxu0 0.0
  %1318 = vmatprep.subr.mxu0 0.0
  %1319 = vmatpush2.msra.mxu0 0.0
  %1320 = vmatprep.subr.mxu0 0.0
  %1321 = vmatpush2.msra.mxu0 0.0
  %1322 = vmatprep.subr.mxu0 0.0
  %1323 = vmatpush2.msra.mxu0 0.0
  %1324 = vmatprep.mubr.f32.mxu0 0.0
  %1325 = vmatmul.mubr.f32.gmra.mxu0 %v1258
  %v1326 = vpop.f32.mrf.mxu0
  %v1327 = vadd.f32 0.0, %v1326
  %v1328 = vpop.f32.mrf.mxu0
  %1329 = vdwg.mxu0
  %v1330 = vadd.f32 %v1121, %v1327
  %v1331 = vxor.u32 %v1330, 2147483648
  %v1332 = vmul.f32 %v1331, 1.442695
  %v1333 = vpow.pop %v1332
  %v1334 = vadd.f32 %v1333, 1.0
  %v1335 = vrcp.pop %v1334
  %v1336 = vmul.f32 1.0, %v1335
  %v1337 = vtanh.pop %v1330
  %v1338 = vmul.f32 %v1336, %v1246
  %1340 = vrot.lane.b32.xlu0 %v1337, 32
  %v1341 = vpop.permute.xlu0 %1340
  %v1343 = vmul.f32 %v1336, %v1341
  %1345 = vrot.lane.b32.xlu0 %v1343, 32
  %v1346 = vpop.permute.xlu0 %1345
  %v1348 = vadd.f32 %v1338, %v1346
  %v1349 = vtanh.pop %v1348
  %1351 = vrot.lane.b32.xlu0 %v1349, 32
  %v1352 = vpop.permute.xlu0 %1351
  %v1354 = vmul.f32 %v1336, %v1352
  %1356 = vrot.lane.b32.xlu0 %v1354, 64
  %v1357 = vpop.permute.xlu0 %1356
  %1359 = vst.msk [vmem:[#allocation2 + $0x8] sm:$0xff] %vm188, %v1357
  %v1360 = vsel %vm188, %v1357, 0
  %1362 = vmatprep.subr.mxu0 0.0
  %1363 = vmatpush1.msra.mxu0 0.0
  %1364 = vmatprep.subr.mxu0 0.0
  %1365 = vmatpush1.msra.mxu0 0.0
  %1366 = vmatprep.subr.mxu0 0.0
  %1367 = vmatpush1.msra.mxu0 0.0
  %1368 = vmatprep.subr.mxu0 0.0
  %1369 = vmatpush1.msra.mxu0 0.0
  %1370 = vmatprep.subr.mxu0 0.0
  %1371 = vmatpush1.msra.mxu0 0.0
  %1372 = vmatprep.subr.mxu0 0.0
  %1373 = vmatpush1.msra.mxu0 0.0
  %1374 = vmatprep.subr.mxu0 0.0
  %1375 = vmatpush1.msra.mxu0 0.0
  %1376 = vmatprep.subr.mxu0 0.0
  %1377 = vmatpush1.msra.mxu0 0.0
  %1378 = vmatprep.subr.mxu0 0.0
  %1379 = vmatpush1.msra.mxu0 0.0
  %1380 = vmatprep.subr.mxu0 0.0
  %1381 = vmatpush1.msra.mxu0 0.0
  %1382 = vmatprep.subr.mxu0 0.0
  %1383 = vmatpush1.msra.mxu0 0.0
  %1384 = vmatprep.subr.mxu0 0.0
  %1385 = vmatpush1.msra.mxu0 0.0
  %1386 = vmatprep.subr.mxu0 0.0
  %1387 = vmatpush1.msra.mxu0 %v1157
  %1388 = vmatprep.subr.mxu0 0.0
  %1389 = vmatpush1.msra.mxu0 %v1156
  %1390 = vmatprep.subr.mxu0 0.0
  %1391 = vmatpush1.msra.mxu0 %v1155
  %1392 = vmatprep.subr.mxu0 0.0
  %1393 = vmatpush1.msra.mxu0 %v1154
  %1394 = vmatprep.subr.mxu0 0.0
  %1395 = vmatpush2.msra.mxu0 0.0
  %1396 = vmatprep.subr.mxu0 0.0
  %1397 = vmatpush2.msra.mxu0 0.0
  %1398 = vmatprep.subr.mxu0 0.0
  %1399 = vmatpush2.msra.mxu0 0.0
  %1400 = vmatprep.subr.mxu0 0.0
  %1401 = vmatpush2.msra.mxu0 0.0
  %1402 = vmatprep.subr.mxu0 0.0
  %1403 = vmatpush2.msra.mxu0 0.0
  %1404 = vmatprep.subr.mxu0 0.0
  %1405 = vmatpush2.msra.mxu0 0.0
  %1406 = vmatprep.subr.mxu0 0.0
  %1407 = vmatpush2.msra.mxu0 0.0
  %1408 = vmatprep.subr.mxu0 0.0
  %1409 = vmatpush2.msra.mxu0 0.0
  %1410 = vmatprep.subr.mxu0 0.0
  %1411 = vmatpush2.msra.mxu0 0.0
  %1412 = vmatprep.subr.mxu0 0.0
  %1413 = vmatpush2.msra.mxu0 0.0
  %1414 = vmatprep.subr.mxu0 0.0
  %1415 = vmatpush2.msra.mxu0 0.0
  %1416 = vmatprep.subr.mxu0 0.0
  %1417 = vmatpush2.msra.mxu0 0.0
  %1418 = vmatprep.subr.mxu0 0.0
  %1419 = vmatpush2.msra.mxu0 0.0
  %1420 = vmatprep.subr.mxu0 0.0
  %1421 = vmatpush2.msra.mxu0 0.0
  %1422 = vmatprep.subr.mxu0 0.0
  %1423 = vmatpush2.msra.mxu0 0.0
  %1424 = vmatprep.subr.mxu0 0.0
  %1425 = vmatpush2.msra.mxu0 0.0
  %1426 = vmatprep.mubr.f32.mxu0 0.0
  %1427 = vmatmul.mubr.f32.gmra.mxu0 %v1360
  %v1428 = vpop.f32.mrf.mxu0
  %v1429 = vadd.f32 0.0, %v1428
  %v1430 = vpop.f32.mrf.mxu0
  %1431 = vdwg.mxu0
  %v1432 = vadd.f32 %v1126, %v1429
  %v1433 = vxor.u32 %v1432, 2147483648
  %v1434 = vmul.f32 %v1433, 1.442695
  %v1435 = vpow.pop %v1434
  %v1436 = vadd.f32 %v1435, 1.0
  %v1437 = vrcp.pop %v1436
  %v1438 = vmul.f32 1.0, %v1437
  %v1439 = vtanh.pop %v1432
  %v1440 = vmul.f32 %v1438, %v1348
  %1442 = vrot.lane.b32.xlu0 %v1439, 32
  %v1443 = vpop.permute.xlu0 %1442
  %v1445 = vmul.f32 %v1438, %v1443
  %1447 = vrot.lane.b32.xlu0 %v1445, 32
  %v1448 = vpop.permute.xlu0 %1447
  %v1450 = vadd.f32 %v1440, %v1448
  %v1451 = vtanh.pop %v1450
  %1453 = vrot.lane.b32.xlu0 %v1451, 32
  %v1454 = vpop.permute.xlu0 %1453
  %v1456 = vmul.f32 %v1438, %v1454
  %1458 = vrot.lane.b32.xlu0 %v1456, 64
  %v1459 = vpop.permute.xlu0 %1458
  %1461 = vst.msk [vmem:[#allocation2 + $0x10] sm:$0xff] %vm188, %v1459
  %v1462 = vsel %vm188, %v1459, 0
  %1464 = vmatprep.subr.mxu0 0.0
  %1465 = vmatpush1.msra.mxu0 0.0
  %1466 = vmatprep.subr.mxu0 0.0
  %1467 = vmatpush1.msra.mxu0 0.0
  %1468 = vmatprep.subr.mxu0 0.0
  %1469 = vmatpush1.msra.mxu0 0.0
  %1470 = vmatprep.subr.mxu0 0.0
  %1471 = vmatpush1.msra.mxu0 0.0
  %1472 = vmatprep.subr.mxu0 0.0
  %1473 = vmatpush1.msra.mxu0 0.0
  %1474 = vmatprep.subr.mxu0 0.0
  %1475 = vmatpush1.msra.mxu0 0.0
  %1476 = vmatprep.subr.mxu0 0.0
  %1477 = vmatpush1.msra.mxu0 0.0
  %1478 = vmatprep.subr.mxu0 0.0
  %1479 = vmatpush1.msra.mxu0 0.0
  %1480 = vmatprep.subr.mxu0 0.0
  %1481 = vmatpush1.msra.mxu0 0.0
  %1482 = vmatprep.subr.mxu0 0.0
  %1483 = vmatpush1.msra.mxu0 0.0
  %1484 = vmatprep.subr.mxu0 0.0
  %1485 = vmatpush1.msra.mxu0 0.0
  %1486 = vmatprep.subr.mxu0 0.0
  %1487 = vmatpush1.msra.mxu0 0.0
  %1488 = vmatprep.subr.mxu0 0.0
  %1489 = vmatpush1.msra.mxu0 %v1157
  %1490 = vmatprep.subr.mxu0 0.0
  %1491 = vmatpush1.msra.mxu0 %v1156
  %1492 = vmatprep.subr.mxu0 0.0
  %1493 = vmatpush1.msra.mxu0 %v1155
  %1494 = vmatprep.subr.mxu0 0.0
  %1495 = vmatpush1.msra.mxu0 %v1154
  %1496 = vmatprep.subr.mxu0 0.0
  %1497 = vmatpush2.msra.mxu0 0.0
  %1498 = vmatprep.subr.mxu0 0.0
  %1499 = vmatpush2.msra.mxu0 0.0
  %1500 = vmatprep.subr.mxu0 0.0
  %1501 = vmatpush2.msra.mxu0 0.0
  %1502 = vmatprep.subr.mxu0 0.0
  %1503 = vmatpush2.msra.mxu0 0.0
  %1504 = vmatprep.subr.mxu0 0.0
  %1505 = vmatpush2.msra.mxu0 0.0
  %1506 = vmatprep.subr.mxu0 0.0
  %1507 = vmatpush2.msra.mxu0 0.0
  %1508 = vmatprep.subr.mxu0 0.0
  %1509 = vmatpush2.msra.mxu0 0.0
  %1510 = vmatprep.subr.mxu0 0.0
  %1511 = vmatpush2.msra.mxu0 0.0
  %1512 = vmatprep.subr.mxu0 0.0
  %1513 = vmatpush2.msra.mxu0 0.0
  %1514 = vmatprep.subr.mxu0 0.0
  %1515 = vmatpush2.msra.mxu0 0.0
  %1516 = vmatprep.subr.mxu0 0.0
  %1517 = vmatpush2.msra.mxu0 0.0
  %1518 = vmatprep.subr.mxu0 0.0
  %1519 = vmatpush2.msra.mxu0 0.0
  %1520 = vmatprep.subr.mxu0 0.0
  %1521 = vmatpush2.msra.mxu0 0.0
  %1522 = vmatprep.subr.mxu0 0.0
  %1523 = vmatpush2.msra.mxu0 0.0
  %1524 = vmatprep.subr.mxu0 0.0
  %1525 = vmatpush2.msra.mxu0 0.0
  %1526 = vmatprep.subr.mxu0 0.0
  %1527 = vmatpush2.msra.mxu0 0.0
  %1528 = vmatprep.mubr.f32.mxu0 0.0
  %1529 = vmatmul.mubr.f32.gmra.mxu0 %v1462
  %v1530 = vpop.f32.mrf.mxu0
  %v1531 = vadd.f32 0.0, %v1530
  %v1532 = vpop.f32.mrf.mxu0
  %1533 = vdwg.mxu0
  %v1534 = vadd.f32 %v1131, %v1531
  %v1535 = vxor.u32 %v1534, 2147483648
  %v1536 = vmul.f32 %v1535, 1.442695
  %v1537 = vpow.pop %v1536
  %v1538 = vadd.f32 %v1537, 1.0
  %v1539 = vrcp.pop %v1538
  %v1540 = vmul.f32 1.0, %v1539
  %v1541 = vtanh.pop %v1534
  %v1542 = vmul.f32 %v1540, %v1450
  %1544 = vrot.lane.b32.xlu0 %v1541, 32
  %v1545 = vpop.permute.xlu0 %1544
  %v1547 = vmul.f32 %v1540, %v1545
  %1549 = vrot.lane.b32.xlu0 %v1547, 32
  %v1550 = vpop.permute.xlu0 %1549
  %v1552 = vadd.f32 %v1542, %v1550
  %v1553 = vtanh.pop %v1552
  %1555 = vrot.lane.b32.xlu0 %v1553, 32
  %v1556 = vpop.permute.xlu0 %1555
  %v1558 = vmul.f32 %v1540, %v1556
  %1560 = vrot.lane.b32.xlu0 %v1558, 64
  %v1561 = vpop.permute.xlu0 %1560
  %1563 = vst.msk [vmem:[#allocation2 + $0x18] sm:$0xff] %vm188, %v1561
  %v1564 = vsel %vm188, %v1561, 0
  %1566 = vmatprep.subr.mxu0 0.0
  %1567 = vmatpush1.msra.mxu0 0.0
  %1568 = vmatprep.subr.mxu0 0.0
  %1569 = vmatpush1.msra.mxu0 0.0
  %1570 = vmatprep.subr.mxu0 0.0
  %1571 = vmatpush1.msra.mxu0 0.0
  %1572 = vmatprep.subr.mxu0 0.0
  %1573 = vmatpush1.msra.mxu0 0.0
  %1574 = vmatprep.subr.mxu0 0.0
  %1575 = vmatpush1.msra.mxu0 0.0
  %1576 = vmatprep.subr.mxu0 0.0
  %1577 = vmatpush1.msra.mxu0 0.0
  %1578 = vmatprep.subr.mxu0 0.0
  %1579 = vmatpush1.msra.mxu0 0.0
  %1580 = vmatprep.subr.mxu0 0.0
  %1581 = vmatpush1.msra.mxu0 0.0
  %1582 = vmatprep.subr.mxu0 0.0
  %1583 = vmatpush1.msra.mxu0 0.0
  %1584 = vmatprep.subr.mxu0 0.0
  %1585 = vmatpush1.msra.mxu0 0.0
  %1586 = vmatprep.subr.mxu0 0.0
  %1587 = vmatpush1.msra.mxu0 0.0
  %1588 = vmatprep.subr.mxu0 0.0
  %1589 = vmatpush1.msra.mxu0 0.0
  %1590 = vmatprep.subr.mxu0 0.0
  %1591 = vmatpush1.msra.mxu0 %v1157
  %1592 = vmatprep.subr.mxu0 0.0
  %1593 = vmatpush1.msra.mxu0 %v1156
  %1594 = vmatprep.subr.mxu0 0.0
  %1595 = vmatpush1.msra.mxu0 %v1155
  %1596 = vmatprep.subr.mxu0 0.0
  %1597 = vmatpush1.msra.mxu0 %v1154
  %1598 = vmatprep.subr.mxu0 0.0
  %1599 = vmatpush2.msra.mxu0 0.0
  %1600 = vmatprep.subr.mxu0 0.0
  %1601 = vmatpush2.msra.mxu0 0.0
  %1602 = vmatprep.subr.mxu0 0.0
  %1603 = vmatpush2.msra.mxu0 0.0
  %1604 = vmatprep.subr.mxu0 0.0
  %1605 = vmatpush2.msra.mxu0 0.0
  %1606 = vmatprep.subr.mxu0 0.0
  %1607 = vmatpush2.msra.mxu0 0.0
  %1608 = vmatprep.subr.mxu0 0.0
  %1609 = vmatpush2.msra.mxu0 0.0
  %1610 = vmatprep.subr.mxu0 0.0
  %1611 = vmatpush2.msra.mxu0 0.0
  %1612 = vmatprep.subr.mxu0 0.0
  %1613 = vmatpush2.msra.mxu0 0.0
  %1614 = vmatprep.subr.mxu0 0.0
  %1615 = vmatpush2.msra.mxu0 0.0
  %1616 = vmatprep.subr.mxu0 0.0
  %1617 = vmatpush2.msra.mxu0 0.0
  %1618 = vmatprep.subr.mxu0 0.0
  %1619 = vmatpush2.msra.mxu0 0.0
  %1620 = vmatprep.subr.mxu0 0.0
  %1621 = vmatpush2.msra.mxu0 0.0
  %1622 = vmatprep.subr.mxu0 0.0
  %1623 = vmatpush2.msra.mxu0 0.0
  %1624 = vmatprep.subr.mxu0 0.0
  %1625 = vmatpush2.msra.mxu0 0.0
  %1626 = vmatprep.subr.mxu0 0.0
  %1627 = vmatpush2.msra.mxu0 0.0
  %1628 = vmatprep.subr.mxu0 0.0
  %1629 = vmatpush2.msra.mxu0 0.0
  %1630 = vmatprep.mubr.f32.mxu0 0.0
  %1631 = vmatmul.mubr.f32.gmra.mxu0 %v1564
  %v1632 = vpop.f32.mrf.mxu0
  %v1633 = vadd.f32 0.0, %v1632
  %v1634 = vpop.f32.mrf.mxu0
  %1635 = vdwg.mxu0
  %v1636 = vadd.f32 %v1136, %v1633
  %v1637 = vxor.u32 %v1636, 2147483648
  %v1638 = vmul.f32 %v1637, 1.442695
  %v1639 = vpow.pop %v1638
  %v1640 = vadd.f32 %v1639, 1.0
  %v1641 = vrcp.pop %v1640
  %v1642 = vmul.f32 1.0, %v1641
  %v1643 = vtanh.pop %v1636
  %v1644 = vmul.f32 %v1642, %v1552
  %1646 = vrot.lane.b32.xlu0 %v1643, 32
  %v1647 = vpop.permute.xlu0 %1646
  %v1649 = vmul.f32 %v1642, %v1647
  %1651 = vrot.lane.b32.xlu0 %v1649, 32
  %v1652 = vpop.permute.xlu0 %1651
  %v1654 = vadd.f32 %v1644, %v1652
  %v1655 = vtanh.pop %v1654
  %1657 = vrot.lane.b32.xlu0 %v1655, 32
  %v1658 = vpop.permute.xlu0 %1657
  %v1660 = vmul.f32 %v1642, %v1658
  %1662 = vrot.lane.b32.xlu0 %v1660, 64
  %v1663 = vpop.permute.xlu0 %1662
  %1665 = vst.msk [vmem:[#allocation2 + $0x20] sm:$0xff] %vm188, %v1663
  %v1666 = vsel %vm188, %v1663, 0
  %1668 = vmatprep.subr.mxu0 0.0
  %1669 = vmatpush1.msra.mxu0 0.0
  %1670 = vmatprep.subr.mxu0 0.0
  %1671 = vmatpush1.msra.mxu0 0.0
  %1672 = vmatprep.subr.mxu0 0.0
  %1673 = vmatpush1.msra.mxu0 0.0
  %1674 = vmatprep.subr.mxu0 0.0
  %1675 = vmatpush1.msra.mxu0 0.0
  %1676 = vmatprep.subr.mxu0 0.0
  %1677 = vmatpush1.msra.mxu0 0.0
  %1678 = vmatprep.subr.mxu0 0.0
  %1679 = vmatpush1.msra.mxu0 0.0
  %1680 = vmatprep.subr.mxu0 0.0
  %1681 = vmatpush1.msra.mxu0 0.0
  %1682 = vmatprep.subr.mxu0 0.0
  %1683 = vmatpush1.msra.mxu0 0.0
  %1684 = vmatprep.subr.mxu0 0.0
  %1685 = vmatpush1.msra.mxu0 0.0
  %1686 = vmatprep.subr.mxu0 0.0
  %1687 = vmatpush1.msra.mxu0 0.0
  %1688 = vmatprep.subr.mxu0 0.0
  %1689 = vmatpush1.msra.mxu0 0.0
  %1690 = vmatprep.subr.mxu0 0.0
  %1691 = vmatpush1.msra.mxu0 0.0
  %1692 = vmatprep.subr.mxu0 0.0
  %1693 = vmatpush1.msra.mxu0 %v1157
  %1694 = vmatprep.subr.mxu0 0.0
  %1695 = vmatpush1.msra.mxu0 %v1156
  %1696 = vmatprep.subr.mxu0 0.0
  %1697 = vmatpush1.msra.mxu0 %v1155
  %1698 = vmatprep.subr.mxu0 0.0
  %1699 = vmatpush1.msra.mxu0 %v1154
  %1700 = vmatprep.subr.mxu0 0.0
  %1701 = vmatpush2.msra.mxu0 0.0
  %1702 = vmatprep.subr.mxu0 0.0
  %1703 = vmatpush2.msra.mxu0 0.0
  %1704 = vmatprep.subr.mxu0 0.0
  %1705 = vmatpush2.msra.mxu0 0.0
  %1706 = vmatprep.subr.mxu0 0.0
  %1707 = vmatpush2.msra.mxu0 0.0
  %1708 = vmatprep.subr.mxu0 0.0
  %1709 = vmatpush2.msra.mxu0 0.0
  %1710 = vmatprep.subr.mxu0 0.0
  %1711 = vmatpush2.msra.mxu0 0.0
  %1712 = vmatprep.subr.mxu0 0.0
  %1713 = vmatpush2.msra.mxu0 0.0
  %1714 = vmatprep.subr.mxu0 0.0
  %1715 = vmatpush2.msra.mxu0 0.0
  %1716 = vmatprep.subr.mxu0 0.0
  %1717 = vmatpush2.msra.mxu0 0.0
  %1718 = vmatprep.subr.mxu0 0.0
  %1719 = vmatpush2.msra.mxu0 0.0
  %1720 = vmatprep.subr.mxu0 0.0
  %1721 = vmatpush2.msra.mxu0 0.0
  %1722 = vmatprep.subr.mxu0 0.0
  %1723 = vmatpush2.msra.mxu0 0.0
  %1724 = vmatprep.subr.mxu0 0.0
  %1725 = vmatpush2.msra.mxu0 0.0
  %1726 = vmatprep.subr.mxu0 0.0
  %1727 = vmatpush2.msra.mxu0 0.0
  %1728 = vmatprep.subr.mxu0 0.0
  %1729 = vmatpush2.msra.mxu0 0.0
  %1730 = vmatprep.subr.mxu0 0.0
  %1731 = vmatpush2.msra.mxu0 0.0
  %1732 = vmatprep.mubr.f32.mxu0 0.0
  %1733 = vmatmul.mubr.f32.gmra.mxu0 %v1666
  %v1734 = vpop.f32.mrf.mxu0
  %v1735 = vadd.f32 0.0, %v1734
  %v1736 = vpop.f32.mrf.mxu0
  %1737 = vdwg.mxu0
  %v1738 = vadd.f32 %v1141, %v1735
  %v1739 = vxor.u32 %v1738, 2147483648
  %v1740 = vmul.f32 %v1739, 1.442695
  %v1741 = vpow.pop %v1740
  %v1742 = vadd.f32 %v1741, 1.0
  %v1743 = vrcp.pop %v1742
  %v1744 = vmul.f32 1.0, %v1743
  %v1745 = vtanh.pop %v1738
  %v1746 = vmul.f32 %v1744, %v1654
  %1748 = vrot.lane.b32.xlu0 %v1745, 32
  %v1749 = vpop.permute.xlu0 %1748
  %v1751 = vmul.f32 %v1744, %v1749
  %1753 = vrot.lane.b32.xlu0 %v1751, 32
  %v1754 = vpop.permute.xlu0 %1753
  %v1756 = vadd.f32 %v1746, %v1754
  %v1757 = vtanh.pop %v1756
  %1759 = vrot.lane.b32.xlu0 %v1757, 32
  %v1760 = vpop.permute.xlu0 %1759
  %v1762 = vmul.f32 %v1744, %v1760
  %1764 = vrot.lane.b32.xlu0 %v1762, 64
  %v1765 = vpop.permute.xlu0 %1764
  %1767 = vst.msk [vmem:[#allocation2 + $0x28] sm:$0xff] %vm188, %v1765
  %v1768 = vsel %vm188, %v1765, 0
  %1770 = vmatprep.subr.mxu0 0.0
  %1771 = vmatpush1.msra.mxu0 0.0
  %1772 = vmatprep.subr.mxu0 0.0
  %1773 = vmatpush1.msra.mxu0 0.0
  %1774 = vmatprep.subr.mxu0 0.0
  %1775 = vmatpush1.msra.mxu0 0.0
  %1776 = vmatprep.subr.mxu0 0.0
  %1777 = vmatpush1.msra.mxu0 0.0
  %1778 = vmatprep.subr.mxu0 0.0
  %1779 = vmatpush1.msra.mxu0 0.0
  %1780 = vmatprep.subr.mxu0 0.0
  %1781 = vmatpush1.msra.mxu0 0.0
  %1782 = vmatprep.subr.mxu0 0.0
  %1783 = vmatpush1.msra.mxu0 0.0
  %1784 = vmatprep.subr.mxu0 0.0
  %1785 = vmatpush1.msra.mxu0 0.0
  %1786 = vmatprep.subr.mxu0 0.0
  %1787 = vmatpush1.msra.mxu0 0.0
  %1788 = vmatprep.subr.mxu0 0.0
  %1789 = vmatpush1.msra.mxu0 0.0
  %1790 = vmatprep.subr.mxu0 0.0
  %1791 = vmatpush1.msra.mxu0 0.0
  %1792 = vmatprep.subr.mxu0 0.0
  %1793 = vmatpush1.msra.mxu0 0.0
  %1794 = vmatprep.subr.mxu0 0.0
  %1795 = vmatpush1.msra.mxu0 %v1157
  %1796 = vmatprep.subr.mxu0 0.0
  %1797 = vmatpush1.msra.mxu0 %v1156
  %1798 = vmatprep.subr.mxu0 0.0
  %1799 = vmatpush1.msra.mxu0 %v1155
  %1800 = vmatprep.subr.mxu0 0.0
  %1801 = vmatpush1.msra.mxu0 %v1154
  %1802 = vmatprep.subr.mxu0 0.0
  %1803 = vmatpush2.msra.mxu0 0.0
  %1804 = vmatprep.subr.mxu0 0.0
  %1805 = vmatpush2.msra.mxu0 0.0
  %1806 = vmatprep.subr.mxu0 0.0
  %1807 = vmatpush2.msra.mxu0 0.0
  %1808 = vmatprep.subr.mxu0 0.0
  %1809 = vmatpush2.msra.mxu0 0.0
  %1810 = vmatprep.subr.mxu0 0.0
  %1811 = vmatpush2.msra.mxu0 0.0
  %1812 = vmatprep.subr.mxu0 0.0
  %1813 = vmatpush2.msra.mxu0 0.0
  %1814 = vmatprep.subr.mxu0 0.0
  %1815 = vmatpush2.msra.mxu0 0.0
  %1816 = vmatprep.subr.mxu0 0.0
  %1817 = vmatpush2.msra.mxu0 0.0
  %1818 = vmatprep.subr.mxu0 0.0
  %1819 = vmatpush2.msra.mxu0 0.0
  %1820 = vmatprep.subr.mxu0 0.0
  %1821 = vmatpush2.msra.mxu0 0.0
  %1822 = vmatprep.subr.mxu0 0.0
  %1823 = vmatpush2.msra.mxu0 0.0
  %1824 = vmatprep.subr.mxu0 0.0
  %1825 = vmatpush2.msra.mxu0 0.0
  %1826 = vmatprep.subr.mxu0 0.0
  %1827 = vmatpush2.msra.mxu0 0.0
  %1828 = vmatprep.subr.mxu0 0.0
  %1829 = vmatpush2.msra.mxu0 0.0
  %1830 = vmatprep.subr.mxu0 0.0
  %1831 = vmatpush2.msra.mxu0 0.0
  %1832 = vmatprep.subr.mxu0 0.0
  %1833 = vmatpush2.msra.mxu0 0.0
  %1834 = vmatprep.mubr.f32.mxu0 0.0
  %1835 = vmatmul.mubr.f32.gmra.mxu0 %v1768
  %v1836 = vpop.f32.mrf.mxu0
  %v1837 = vadd.f32 0.0, %v1836
  %v1838 = vpop.f32.mrf.mxu0
  %1839 = vdwg.mxu0
  %v1840 = vadd.f32 %v1146, %v1837
  %v1841 = vxor.u32 %v1840, 2147483648
  %v1842 = vmul.f32 %v1841, 1.442695
  %v1843 = vpow.pop %v1842
  %v1844 = vadd.f32 %v1843, 1.0
  %v1845 = vrcp.pop %v1844
  %v1846 = vmul.f32 1.0, %v1845
  %v1847 = vtanh.pop %v1840
  %v1848 = vmul.f32 %v1846, %v1756
  %1850 = vrot.lane.b32.xlu0 %v1847, 32
  %v1851 = vpop.permute.xlu0 %1850
  %v1853 = vmul.f32 %v1846, %v1851
  %1855 = vrot.lane.b32.xlu0 %v1853, 32
  %v1856 = vpop.permute.xlu0 %1855
  %v1858 = vadd.f32 %v1848, %v1856
  %v1859 = vtanh.pop %v1858
  %1861 = vrot.lane.b32.xlu0 %v1859, 32
  %v1862 = vpop.permute.xlu0 %1861
  %v1864 = vmul.f32 %v1846, %v1862
  %1866 = vrot.lane.b32.xlu0 %v1864, 64
  %v1867 = vpop.permute.xlu0 %1866
  %1869 = vst.msk [vmem:[#allocation2 + $0x30] sm:$0xff] %vm188, %v1867
  %v1870 = vsel %vm188, %v1867, 0
  %1872 = vmatprep.subr.mxu0 0.0
  %1873 = vmatpush1.msra.mxu0 0.0
  %1874 = vmatprep.subr.mxu0 0.0
  %1875 = vmatpush1.msra.mxu0 0.0
  %1876 = vmatprep.subr.mxu0 0.0
  %1877 = vmatpush1.msra.mxu0 0.0
  %1878 = vmatprep.subr.mxu0 0.0
  %1879 = vmatpush1.msra.mxu0 0.0
  %1880 = vmatprep.subr.mxu0 0.0
  %1881 = vmatpush1.msra.mxu0 0.0
  %1882 = vmatprep.subr.mxu0 0.0
  %1883 = vmatpush1.msra.mxu0 0.0
  %1884 = vmatprep.subr.mxu0 0.0
  %1885 = vmatpush1.msra.mxu0 0.0
  %1886 = vmatprep.subr.mxu0 0.0
  %1887 = vmatpush1.msra.mxu0 0.0
  %1888 = vmatprep.subr.mxu0 0.0
  %1889 = vmatpush1.msra.mxu0 0.0
  %1890 = vmatprep.subr.mxu0 0.0
  %1891 = vmatpush1.msra.mxu0 0.0
  %1892 = vmatprep.subr.mxu0 0.0
  %1893 = vmatpush1.msra.mxu0 0.0
  %1894 = vmatprep.subr.mxu0 0.0
  %1895 = vmatpush1.msra.mxu0 0.0
  %1896 = vmatprep.subr.mxu0 0.0
  %1897 = vmatpush1.msra.mxu0 %v1157
  %1898 = vmatprep.subr.mxu0 0.0
  %1899 = vmatpush1.msra.mxu0 %v1156
  %1900 = vmatprep.subr.mxu0 0.0
  %1901 = vmatpush1.msra.mxu0 %v1155
  %1902 = vmatprep.subr.mxu0 0.0
  %1903 = vmatpush1.msra.mxu0 %v1154
  %1904 = vmatprep.subr.mxu0 0.0
  %1905 = vmatpush2.msra.mxu0 0.0
  %1906 = vmatprep.subr.mxu0 0.0
  %1907 = vmatpush2.msra.mxu0 0.0
  %1908 = vmatprep.subr.mxu0 0.0
  %1909 = vmatpush2.msra.mxu0 0.0
  %1910 = vmatprep.subr.mxu0 0.0
  %1911 = vmatpush2.msra.mxu0 0.0
  %1912 = vmatprep.subr.mxu0 0.0
  %1913 = vmatpush2.msra.mxu0 0.0
  %1914 = vmatprep.subr.mxu0 0.0
  %1915 = vmatpush2.msra.mxu0 0.0
  %1916 = vmatprep.subr.mxu0 0.0
  %1917 = vmatpush2.msra.mxu0 0.0
  %1918 = vmatprep.subr.mxu0 0.0
  %1919 = vmatpush2.msra.mxu0 0.0
  %1920 = vmatprep.subr.mxu0 0.0
  %1921 = vmatpush2.msra.mxu0 0.0
  %1922 = vmatprep.subr.mxu0 0.0
  %1923 = vmatpush2.msra.mxu0 0.0
  %1924 = vmatprep.subr.mxu0 0.0
  %1925 = vmatpush2.msra.mxu0 0.0
  %1926 = vmatprep.subr.mxu0 0.0
  %1927 = vmatpush2.msra.mxu0 0.0
  %1928 = vmatprep.subr.mxu0 0.0
  %1929 = vmatpush2.msra.mxu0 0.0
  %1930 = vmatprep.subr.mxu0 0.0
  %1931 = vmatpush2.msra.mxu0 0.0
  %1932 = vmatprep.subr.mxu0 0.0
  %1933 = vmatpush2.msra.mxu0 0.0
  %1934 = vmatprep.subr.mxu0 0.0
  %1935 = vmatpush2.msra.mxu0 0.0
  %1936 = vmatprep.mubr.f32.mxu0 0.0
  %1937 = vmatmul.mubr.f32.gmra.mxu0 %v1870
  %v1938 = vpop.f32.mrf.mxu0
  %v1939 = vadd.f32 0.0, %v1938
  %v1940 = vpop.f32.mrf.mxu0
  %1941 = vdwg.mxu0
  %v1942 = vadd.f32 %v1151, %v1939
  %v1943 = vxor.u32 %v1942, 2147483648
  %v1944 = vmul.f32 %v1943, 1.442695
  %v1945 = vpow.pop %v1944
  %v1946 = vadd.f32 %v1945, 1.0
  %v1947 = vrcp.pop %v1946
  %v1948 = vmul.f32 1.0, %v1947
  %v1949 = vtanh.pop %v1942
  %v1950 = vmul.f32 %v1948, %v1858
  %1952 = vrot.lane.b32.xlu0 %v1949, 32
  %v1953 = vpop.permute.xlu0 %1952
  %v1955 = vmul.f32 %v1948, %v1953
  %1957 = vrot.lane.b32.xlu0 %v1955, 32
  %v1958 = vpop.permute.xlu0 %1957
  %v1960 = vadd.f32 %v1950, %v1958
  %v1961 = vtanh.pop %v1960
  %1963 = vrot.lane.b32.xlu0 %v1961, 32
  %v1964 = vpop.permute.xlu0 %1963
  %v1966 = vmul.f32 %v1948, %v1964
  %1968 = vrot.lane.b32.xlu0 %v1966, 64
  %v1969 = vpop.permute.xlu0 %1968
  %1971 = vst.msk [vmem:[#allocation2 + $0x38] sm:$0xff] %vm188, %v1969
  %v1972 = vld [vmem:[#allocation2 + $0x38] sm:$0xff]
  %v1973 = vld [vmem:[%s7] sm:$0xff]
  %v1974 = vld [vmem:[%s7 + $0x8] sm:$0xff]
  %v1975 = vld [vmem:[%s7 + $0x10] sm:$0xff]
  %v1976 = vld [vmem:[%s7 + $0x18] sm:$0xff]
  %v1977 = vld [vmem:[#allocation3] sm:$0x1]
  %v1979 = vlaneseq
  %v1980 = vshrl.u32 %v1979, 7
  %v1981 = vsub.s32 0, %v1980
  %v1982 = vrot.slane %v1977, %v1981
  %v1985 = vsel %vm188, %v1972, 0
  %1987 = vmatprep.subr.mxu0 0.0
  %1988 = vmatpush1.msra.mxu0 0.0
  %1989 = vmatprep.subr.mxu0 0.0
  %1990 = vmatpush1.msra.mxu0 0.0
  %1991 = vmatprep.subr.mxu0 0.0
  %1992 = vmatpush1.msra.mxu0 0.0
  %1993 = vmatprep.subr.mxu0 0.0
  %1994 = vmatpush1.msra.mxu0 0.0
  %1995 = vmatprep.subr.mxu0 0.0
  %1996 = vmatpush1.msra.mxu0 0.0
  %1997 = vmatprep.subr.mxu0 0.0
  %1998 = vmatpush1.msra.mxu0 0.0
  %1999 = vmatprep.subr.mxu0 0.0
  %2000 = vmatpush1.msra.mxu0 0.0
  %2001 = vmatprep.subr.mxu0 0.0
  %2002 = vmatpush1.msra.mxu0 0.0
  %2003 = vmatprep.subr.mxu0 0.0
  %2004 = vmatpush1.msra.mxu0 0.0
  %2005 = vmatprep.subr.mxu0 0.0
  %2006 = vmatpush1.msra.mxu0 0.0
  %2007 = vmatprep.subr.mxu0 0.0
  %2008 = vmatpush1.msra.mxu0 0.0
  %2009 = vmatprep.subr.mxu0 0.0
  %2010 = vmatpush1.msra.mxu0 0.0
  %2011 = vmatprep.subr.mxu0 0.0
  %2012 = vmatpush1.msra.mxu0 %v1976
  %2013 = vmatprep.subr.mxu0 0.0
  %2014 = vmatpush1.msra.mxu0 %v1975
  %2015 = vmatprep.subr.mxu0 0.0
  %2016 = vmatpush1.msra.mxu0 %v1974
  %2017 = vmatprep.subr.mxu0 0.0
  %2018 = vmatpush1.msra.mxu0 %v1973
  %2019 = vmatprep.subr.mxu0 0.0
  %2020 = vmatpush2.msra.mxu0 0.0
  %2021 = vmatprep.subr.mxu0 0.0
  %2022 = vmatpush2.msra.mxu0 0.0
  %2023 = vmatprep.subr.mxu0 0.0
  %2024 = vmatpush2.msra.mxu0 0.0
  %2025 = vmatprep.subr.mxu0 0.0
  %2026 = vmatpush2.msra.mxu0 0.0
  %2027 = vmatprep.subr.mxu0 0.0
  %2028 = vmatpush2.msra.mxu0 0.0
  %2029 = vmatprep.subr.mxu0 0.0
  %2030 = vmatpush2.msra.mxu0 0.0
  %2031 = vmatprep.subr.mxu0 0.0
  %2032 = vmatpush2.msra.mxu0 0.0
  %2033 = vmatprep.subr.mxu0 0.0
  %2034 = vmatpush2.msra.mxu0 0.0
  %2035 = vmatprep.subr.mxu0 0.0
  %2036 = vmatpush2.msra.mxu0 0.0
  %2037 = vmatprep.subr.mxu0 0.0
  %2038 = vmatpush2.msra.mxu0 0.0
  %2039 = vmatprep.subr.mxu0 0.0
  %2040 = vmatpush2.msra.mxu0 0.0
  %2041 = vmatprep.subr.mxu0 0.0
  %2042 = vmatpush2.msra.mxu0 0.0
  %2043 = vmatprep.subr.mxu0 0.0
  %2044 = vmatpush2.msra.mxu0 0.0
  %2045 = vmatprep.subr.mxu0 0.0
  %2046 = vmatpush2.msra.mxu0 0.0
  %2047 = vmatprep.subr.mxu0 0.0
  %2048 = vmatpush2.msra.mxu0 0.0
  %2049 = vmatprep.subr.mxu0 0.0
  %2050 = vmatpush2.msra.mxu0 0.0
  %2051 = vmatprep.mubr.f32.mxu0 0.0
  %2052 = vmatmul.mubr.f32.gmra.mxu0 %v1985
  %v2053 = vpop.f32.mrf.mxu0
  %v2054 = vadd.f32 %v1982, %v2053
  %v2055 = vpop.f32.mrf.mxu0
  %2056 = vdwg.mxu0
  %vm2057 = vcmask 7168
  %2058 = vst.msk [vmem:[%s9] sm:$0xff] %vm2057, %v2054
  // Predicated region
  $region38: #{tpu_custom_call.1} parent=0 // pred_check
    _
  $region39: #{tpu_custom_call.1} parent=0 // pred_check_branch
    %2060 = sbr.rel (0) target = $region41
  $region40: #{tpu_custom_call.1} parent=0 // pred_region
    _
  $region41: #{tpu_custom_call.1} parent=0 // pred_fallthru
    _
  // Predicated region
  $region42: #{tpu_custom_call.1} parent=0 // pred_check
    _
  $region43: #{tpu_custom_call.1} parent=0 // pred_check_branch
    %2062 = sbr.rel (0) target = $region45
  $region44: #{tpu_custom_call.1} parent=0 // pred_region
    _
  $region45: #{tpu_custom_call.1} parent=0 // pred_fallthru
    _

</llo_original>
